<compile_context>
chip_gen: v5e
topology: v5e:2x2
jax: 0.10.0
libtpu: 0.0.40
codegen_flags: <defaults>
</compile_context>

<pallas_src>
import jax
import jax.numpy as jnp
from jax.experimental import pallas as pl
from jax.experimental.pallas import tpu as pltpu


def stacked_attention_kernel(
    images_ref,   # (B, S, D_img)
    q_ref,        # (B, 1, D_q)
    wimg_ref,     # (D_img, H)
    bimg_ref,     # (1, H)
    wq_ref,       # (D_q, H)
    bq_ref,       # (1, H)
    watt_ref,     # (1, H)   ff_attention weight kept as a row vector
    wi2q_ref,     # (D_img, D_q)
    bi2q_ref,     # (1, D_q)
    out_ref,      # (B, 1, D_q)
):
    B, S, D_img = images_ref.shape
    H = wimg_ref.shape[1]
    D_q = wq_ref.shape[0]

    img = images_ref[...]                          # (B, S, D_img)
    q = q_ref[...].reshape(B, D_q)                 # (B, D_q)

    # hi = ff_image(images): one big (B*S, D_img) @ (D_img, H) MXU matmul.
    hi = jnp.dot(img.reshape(B * S, D_img), wimg_ref[...],
                 preferred_element_type=jnp.float32) + bimg_ref[...]      # (B*S, H)
    # hq = ff_ques(questions): (B, D_q) @ (D_q, H)
    hq = jnp.dot(q, wq_ref[...], preferred_element_type=jnp.float32) + bq_ref[...]  # (B, H)

    # ha = tanh(hi + hq), broadcasting hq over the S spatial positions.
    ha = jnp.tanh(hi.reshape(B, S, H) + hq[:, None, :])                   # (B, S, H)

    # ff_attention(ha) on the MXU, producing logits with S on the lane axis.
    # The ff_attention bias is a constant offset that cancels in the softmax.
    w_att = jnp.broadcast_to(watt_ref[...].reshape(1, 1, H), (B, 1, H))
    logits = jnp.einsum("bqh,bsh->bqs", w_att, ha,
                        preferred_element_type=jnp.float32)               # (B, 1, S)

    # Softmax over the spatial axis (lanes); reciprocal goes to the EUP slot.
    m = jnp.max(logits, axis=2, keepdims=True)
    e = jnp.exp(logits - m)
    denom = jnp.sum(e, axis=2, keepdims=True)
    pi = e * pl.reciprocal(denom, approx=True)                            # (B, 1, S)

    # Attention-weighted sum of image features — also an MXU contraction over S.
    attended = jnp.einsum("bqs,bsd->bqd", pi, img,
                          preferred_element_type=jnp.float32)             # (B, 1, D_img)

    # u = i2q(attended) + questions
    u = jnp.dot(attended.reshape(B, D_img), wi2q_ref[...],
                preferred_element_type=jnp.float32) + bi2q_ref[...] + q   # (B, D_q)
    out_ref[...] = u.reshape(B, 1, D_q)


def stacked_attention(images, questions, params, *, batch_block=4):
    """images: (N, S, D_img) f32 ; questions: (N, D_q) f32 -> (N, D_q) f32."""
    N, S, D_img = images.shape
    _, D_q = questions.shape
    H = params["w_img"].shape[1]

    B = min(batch_block, N)
    n_pad = (-N) % B
    if n_pad:
        images = jnp.pad(images, ((0, n_pad), (0, 0), (0, 0)))
        questions = jnp.pad(questions, ((0, n_pad), (0, 0)))
    Np = N + n_pad

    q3 = questions.reshape(Np, 1, D_q)

    # Grid-invariant (weight/bias) blocks: index_map always returns block 0.
    # NOTE: at production sizes on v7x/v5e, these specs can additionally be
    # single-buffered (pipeline_mode=pl.Buffered(1)) to halve their VMEM footprint.
    full = lambda shape: pl.BlockSpec(shape, lambda n: tuple(0 for _ in shape))

    out = pl.pallas_call(
        stacked_attention_kernel,
        out_shape=jax.ShapeDtypeStruct((Np, 1, D_q), jnp.float32),
        grid_spec=pltpu.PrefetchScalarGridSpec(
            num_scalar_prefetch=0,
            grid=(Np // B,),
            in_specs=[
                pl.BlockSpec((B, S, D_img), lambda n: (n, 0, 0)),
                pl.BlockSpec((B, 1, D_q), lambda n: (n, 0, 0)),
                full((D_img, H)),
                full((1, H)),
                full((D_q, H)),
                full((1, H)),
                full((1, H)),
                full((D_img, D_q)),
                full((1, D_q)),
            ],
            out_specs=pl.BlockSpec((B, 1, D_q), lambda n: (n, 0, 0)),
        ),
        compiler_params=pltpu.CompilerParams(
            dimension_semantics=("parallel",),
            vmem_limit_bytes=32 * 1024 * 1024,
        ),
    )(
        images, q3,
        params["w_img"], params["b_img"],
        params["w_q"], params["b_q"],
        params["w_att"],
        params["w_i2q"], params["b_i2q"],
    )
    return out.reshape(Np, D_q)[:N]


def make_params(key, d_img, d_q, hidden):
    """Deterministic params matching StackedAttention.init_weights (normal(0, 0.02), zero bias)."""
    k1, k2, k3, k4 = jax.random.split(key, 4)
    # Stored already transposed to (in, out) so the kernel computes x @ W + b.
    return {
        "w_img": (0.02 * jax.random.normal(k1, (d_img, hidden))).astype(jnp.float32),
        "b_img": jnp.zeros((1, hidden), jnp.float32),
        "w_q": (0.02 * jax.random.normal(k2, (d_q, hidden))).astype(jnp.float32),
        "b_q": jnp.zeros((1, hidden), jnp.float32),
        "w_att": (0.02 * jax.random.normal(k3, (1, hidden))).astype(jnp.float32),
        "b_att": jnp.zeros((1, 1), jnp.float32),  # cancels in the softmax; not passed to the kernel
        "w_i2q": (0.02 * jax.random.normal(k4, (d_img, d_q))).astype(jnp.float32),
        "b_i2q": jnp.zeros((1, d_q), jnp.float32),
    }


def stacked_attention_ref(images, questions, params):
    """Pure-JAX reference of the PyTorch forward (dropout in eval mode)."""
    hi = jnp.einsum("nsd,dh->nsh", images, params["w_img"]) + params["b_img"]
    hq = (questions @ params["w_q"] + params["b_q"])[:, None, :]
    ha = jnp.tanh(hi + hq)
    logits = jnp.sum(ha * params["w_att"][None, :, :], axis=2) + params["b_att"][0, 0]  # (N, S)
    pi = jax.nn.softmax(logits, axis=1)
    attended = jnp.sum(pi[:, :, None] * images, axis=1)  # (N, D_img)
    return attended @ params["w_i2q"] + params["b_i2q"] + questions


if __name__ == "__main__":
    N, S, D_IMG, D_Q, HIDDEN = 8, 64, 256, 256, 128

    key = jax.random.PRNGKey(0)
    k_img, k_q, k_p = jax.random.split(key, 3)

    images = jax.random.normal(k_img, (N, S, D_IMG), dtype=jnp.float32)
    questions = jax.random.normal(k_q, (N, D_Q), dtype=jnp.float32)
    params = make_params(k_p, D_IMG, D_Q, HIDDEN)

    out = stacked_attention(images, questions, params, batch_block=4)
    out = jax.block_until_ready(out)

    ref = stacked_attention_ref(images, questions, params)
    assert out.shape == (N, D_Q)
    # Tolerance loosened slightly vs exact f32 because of the EUP approx reciprocal
    # in the softmax normalization.
    assert jnp.allclose(out, ref, atol=1e-3, rtol=1e-3), "mismatch vs reference"

    print("KERNEL_OK")
</pallas_src>

<mosaic_0001>
module attributes {stable_mosaic.version = 11 : i64} {
  func.func @stacked_attention_kernel(%arg0: i32, %arg1: memref<4x64x256xf32, #tpu.memory_space<vmem>>, %arg2: memref<4x1x256xf32, #tpu.memory_space<vmem>>, %arg3: memref<256x128xf32, #tpu.memory_space<vmem>>, %arg4: memref<1x128xf32, #tpu.memory_space<vmem>>, %arg5: memref<256x128xf32, #tpu.memory_space<vmem>>, %arg6: memref<1x128xf32, #tpu.memory_space<vmem>>, %arg7: memref<1x128xf32, #tpu.memory_space<vmem>>, %arg8: memref<256x256xf32, #tpu.memory_space<vmem>>, %arg9: memref<1x256xf32, #tpu.memory_space<vmem>>, %arg10: memref<4x1x256xf32, #tpu.memory_space<vmem>>) attributes {dimension_semantics = [#tpu.dimension_semantics<parallel>], iteration_bounds = array<i64: 2>, scalar_prefetch = 0 : i64, scratch_operands = 0 : i64, tpu.core_type = #tpu.core_type<tc>, window_params = [{transform_indices = @transform_0, window_bounds = array<i64: 4, 64, 256>}, {transform_indices = @transform_1, window_bounds = array<i64: 4, 1, 256>}, {pipeline_mode = #tpu.pipeline_mode<synchronous>, transform_indices = @transform_2, window_bounds = array<i64: 256, 128>}, {pipeline_mode = #tpu.pipeline_mode<synchronous>, transform_indices = @transform_3, window_bounds = array<i64: 1, 128>}, {pipeline_mode = #tpu.pipeline_mode<synchronous>, transform_indices = @transform_4, window_bounds = array<i64: 256, 128>}, {pipeline_mode = #tpu.pipeline_mode<synchronous>, transform_indices = @transform_5, window_bounds = array<i64: 1, 128>}, {pipeline_mode = #tpu.pipeline_mode<synchronous>, transform_indices = @transform_6, window_bounds = array<i64: 1, 128>}, {pipeline_mode = #tpu.pipeline_mode<synchronous>, transform_indices = @transform_7, window_bounds = array<i64: 256, 256>}, {pipeline_mode = #tpu.pipeline_mode<synchronous>, transform_indices = @transform_8, window_bounds = array<i64: 1, 256>}, {transform_indices = @transform_9, window_bounds = array<i64: 4, 1, 256>}]} {
    %c0 = arith.constant 0 : index
    %c0_0 = arith.constant 0 : index
    %c0_1 = arith.constant 0 : index
    %0 = vector.load %arg1[%c0, %c0_0, %c0_1] : memref<4x64x256xf32, #tpu.memory_space<vmem>>, vector<4x64x256xf32>
    %c0_2 = arith.constant 0 : index
    %c0_3 = arith.constant 0 : index
    %c0_4 = arith.constant 0 : index
    %1 = vector.load %arg2[%c0_2, %c0_3, %c0_4] : memref<4x1x256xf32, #tpu.memory_space<vmem>>, vector<4x1x256xf32>
    %2 = vector.shape_cast %1 : vector<4x1x256xf32> to vector<4x256xf32>
    %3 = vector.shape_cast %0 : vector<4x64x256xf32> to vector<256x256xf32>
    %c0_5 = arith.constant 0 : index
    %c0_6 = arith.constant 0 : index
    %4 = vector.load %arg3[%c0_5, %c0_6] : memref<256x128xf32, #tpu.memory_space<vmem>>, vector<256x128xf32>
    %cst = arith.constant dense<0.000000e+00> : vector<256x128xf32>
    %5 = tpu.matmul %3, %4, %cst {dimension_numbers = #tpu.dot_dimension_numbers<[1], [0], [0], [1], [0, 0, 1, 1], [], []>} : vector<256x256xf32>, vector<256x128xf32>, vector<256x128xf32> -> vector<256x128xf32>
    %c0_7 = arith.constant 0 : index
    %c0_8 = arith.constant 0 : index
    %6 = vector.load %arg4[%c0_7, %c0_8] : memref<1x128xf32, #tpu.memory_space<vmem>>, vector<1x128xf32>
    %7 = vector.broadcast %6 : vector<1x128xf32> to vector<256x128xf32>
    %8 = arith.addf %5, %7 : vector<256x128xf32>
    %c0_9 = arith.constant 0 : index
    %c0_10 = arith.constant 0 : index
    %9 = vector.load %arg5[%c0_9, %c0_10] : memref<256x128xf32, #tpu.memory_space<vmem>>, vector<256x128xf32>
    %cst_11 = arith.constant dense<0.000000e+00> : vector<4x128xf32>
    %10 = tpu.matmul %2, %9, %cst_11 {dimension_numbers = #tpu.dot_dimension_numbers<[1], [0], [0], [1], [0, 0, 1, 1], [], []>} : vector<4x256xf32>, vector<256x128xf32>, vector<4x128xf32> -> vector<4x128xf32>
    %c0_12 = arith.constant 0 : index
    %c0_13 = arith.constant 0 : index
    %11 = vector.load %arg6[%c0_12, %c0_13] : memref<1x128xf32, #tpu.memory_space<vmem>>, vector<1x128xf32>
    %12 = vector.broadcast %11 : vector<1x128xf32> to vector<4x128xf32>
    %13 = arith.addf %10, %12 : vector<4x128xf32>
    %14 = vector.shape_cast %8 : vector<256x128xf32> to vector<4x64x128xf32>
    %15 = vector.shape_cast %13 : vector<4x128xf32> to vector<4x1x128xf32>
    %16 = vector.broadcast %15 : vector<4x1x128xf32> to vector<4x64x128xf32>
    %17 = arith.addf %14, %16 : vector<4x64x128xf32>
    %18 = math.tanh %17 : vector<4x64x128xf32>
    %c0_14 = arith.constant 0 : index
    %c0_15 = arith.constant 0 : index
    %19 = vector.load %arg7[%c0_14, %c0_15] : memref<1x128xf32, #tpu.memory_space<vmem>>, vector<1x128xf32>
    %20 = vector.shape_cast %19 : vector<1x128xf32> to vector<1x1x128xf32>
    %21 = vector.shape_cast %20 : vector<1x1x128xf32> to vector<1x1x128xf32>
    %22 = vector.broadcast %21 : vector<1x1x128xf32> to vector<4x1x128xf32>
    "tpu.trace_start"() <{level = 10 : i32, message = "bqh,bsh->bqs"}> : () -> ()
    %cst_16 = arith.constant dense<0.000000e+00> : vector<4x1x64xf32>
    %23 = tpu.matmul %22, %18, %cst_16 {dimension_numbers = #tpu.dot_dimension_numbers<[2], [2], [1], [1], [0, 0, 0, 1, 1, 1], [0], [0]>} : vector<4x1x128xf32>, vector<4x64x128xf32>, vector<4x1x64xf32> -> vector<4x1x64xf32>
    "tpu.trace_stop"() : () -> ()
    %cst_17 = arith.constant dense<0xFF800000> : vector<4x1xf32>
    %24 = vector.multi_reduction <maximumf>, %23, %cst_17 [2] : vector<4x1x64xf32> to vector<4x1xf32>
    %25 = vector.shape_cast %24 : vector<4x1xf32> to vector<4x1x1xf32>
    %26 = vector.broadcast %25 : vector<4x1x1xf32> to vector<4x1x64xf32>
    %27 = arith.subf %23, %26 : vector<4x1x64xf32>
    %28 = math.exp %27 : vector<4x1x64xf32>
    %cst_18 = arith.constant dense<0.000000e+00> : vector<4x1xf32>
    %29 = vector.multi_reduction <add>, %28, %cst_18 [2] : vector<4x1x64xf32> to vector<4x1xf32>
    %30 = vector.shape_cast %29 : vector<4x1xf32> to vector<4x1x1xf32>
    %31 = tpu.reciprocal %30 {approx = true} : vector<4x1x1xf32> -> vector<4x1x1xf32>
    %32 = vector.broadcast %31 : vector<4x1x1xf32> to vector<4x1x64xf32>
    %33 = arith.mulf %28, %32 : vector<4x1x64xf32>
    "tpu.trace_start"() <{level = 10 : i32, message = "bqs,bsd->bqd"}> : () -> ()
    %cst_19 = arith.constant dense<0.000000e+00> : vector<4x1x256xf32>
    %34 = tpu.matmul %33, %0, %cst_19 {dimension_numbers = #tpu.dot_dimension_numbers<[2], [1], [1], [2], [0, 0, 0, 1, 1, 2], [0], [0]>} : vector<4x1x64xf32>, vector<4x64x256xf32>, vector<4x1x256xf32> -> vector<4x1x256xf32>
    "tpu.trace_stop"() : () -> ()
    %35 = vector.shape_cast %34 : vector<4x1x256xf32> to vector<4x256xf32>
    %c0_20 = arith.constant 0 : index
    %c0_21 = arith.constant 0 : index
    %36 = vector.load %arg8[%c0_20, %c0_21] : memref<256x256xf32, #tpu.memory_space<vmem>>, vector<256x256xf32>
    %cst_22 = arith.constant dense<0.000000e+00> : vector<4x256xf32>
    %37 = tpu.matmul %35, %36, %cst_22 {dimension_numbers = #tpu.dot_dimension_numbers<[1], [0], [0], [1], [0, 0, 1, 1], [], []>} : vector<4x256xf32>, vector<256x256xf32>, vector<4x256xf32> -> vector<4x256xf32>
    %c0_23 = arith.constant 0 : index
    %c0_24 = arith.constant 0 : index
    %38 = vector.load %arg9[%c0_23, %c0_24] : memref<1x256xf32, #tpu.memory_space<vmem>>, vector<1x256xf32>
    %39 = vector.broadcast %38 : vector<1x256xf32> to vector<4x256xf32>
    %40 = arith.addf %37, %39 : vector<4x256xf32>
    %41 = arith.addf %40, %2 : vector<4x256xf32>
    %42 = vector.shape_cast %41 : vector<4x256xf32> to vector<4x1x256xf32>
    %c0_25 = arith.constant 0 : index
    %c0_26 = arith.constant 0 : index
    %c0_27 = arith.constant 0 : index
    %43 = vector.load %arg10[%c0_25, %c0_26, %c0_27] : memref<4x1x256xf32, #tpu.memory_space<vmem>>, vector<4x1x256xf32>
    tpu.vector_store %arg10[%c0_25, %c0_26, %c0_27], %42 {strides = array<i32>} : memref<4x1x256xf32, #tpu.memory_space<vmem>>, vector<4x1x256xf32>,
    return
  }
  func.func @transform_0(%arg0: i32) -> (i32, i32, i32) {
    %c0_i32 = arith.constant 0 : i32
    %c0_i32_0 = arith.constant 0 : i32
    %c0_i32_1 = arith.constant 0 : i32
    return %arg0, %c0_i32, %c0_i32_0 : i32, i32, i32
  }
  func.func @transform_1(%arg0: i32) -> (i32, i32, i32) {
    %c0_i32 = arith.constant 0 : i32
    %c0_i32_0 = arith.constant 0 : i32
    %c0_i32_1 = arith.constant 0 : i32
    return %arg0, %c0_i32, %c0_i32_0 : i32, i32, i32
  }
  func.func @transform_2(%arg0: i32) -> (i32, i32) {
    %c0_i32 = arith.constant 0 : i32
    %c0_i32_0 = arith.constant 0 : i32
    %c0_i32_1 = arith.constant 0 : i32
    return %c0_i32, %c0_i32_0 : i32, i32
  }
  func.func @transform_3(%arg0: i32) -> (i32, i32) {
    %c0_i32 = arith.constant 0 : i32
    %c0_i32_0 = arith.constant 0 : i32
    %c0_i32_1 = arith.constant 0 : i32
    return %c0_i32, %c0_i32_0 : i32, i32
  }
  func.func @transform_4(%arg0: i32) -> (i32, i32) {
    %c0_i32 = arith.constant 0 : i32
    %c0_i32_0 = arith.constant 0 : i32
    %c0_i32_1 = arith.constant 0 : i32
    return %c0_i32, %c0_i32_0 : i32, i32
  }
  func.func @transform_5(%arg0: i32) -> (i32, i32) {
    %c0_i32 = arith.constant 0 : i32
    %c0_i32_0 = arith.constant 0 : i32
    %c0_i32_1 = arith.constant 0 : i32
    return %c0_i32, %c0_i32_0 : i32, i32
  }
  func.func @transform_6(%arg0: i32) -> (i32, i32) {
    %c0_i32 = arith.constant 0 : i32
    %c0_i32_0 = arith.constant 0 : i32
    %c0_i32_1 = arith.constant 0 : i32
    return %c0_i32, %c0_i32_0 : i32, i32
  }
  func.func @transform_7(%arg0: i32) -> (i32, i32) {
    %c0_i32 = arith.constant 0 : i32
    %c0_i32_0 = arith.constant 0 : i32
    %c0_i32_1 = arith.constant 0 : i32
    return %c0_i32, %c0_i32_0 : i32, i32
  }
  func.func @transform_8(%arg0: i32) -> (i32, i32) {
    %c0_i32 = arith.constant 0 : i32
    %c0_i32_0 = arith.constant 0 : i32
    %c0_i32_1 = arith.constant 0 : i32
    return %c0_i32, %c0_i32_0 : i32, i32
  }
  func.func @transform_9(%arg0: i32) -> (i32, i32, i32) {
    %c0_i32 = arith.constant 0 : i32
    %c0_i32_0 = arith.constant 0 : i32
    %c0_i32_1 = arith.constant 0 : i32
    return %arg0, %c0_i32, %c0_i32_0 : i32, i32, i32
  }
}

</mosaic_0001>

<llo_original>
// kernel: tpu_custom_call.1
$region0: #{tpu_custom_call.1}
  #allocation0 [shape = 'u32[]', space=smem, size = 0x4, offset = 0x4, fixed_abs, tag = 'smem constant byte address 0x4 - core index']
  #allocation1 [shape = 'u32[72,128]{1,0:T(1,128)}', space=vmem, size = 0x9000, scoped, tag = 'internal scratch']
  %s0 = inlined_call_operand.hbm [shape: f32[8,64,256], index: 0, kind: input, shape index: {}]
  %s1 = inlined_call_operand.hbm [shape: f32[8,1,256], index: 1, kind: input, shape index: {}]
  %s2 = inlined_call_operand.hbm [shape: f32[256,128], index: 2, kind: input, shape index: {}]
  %s3 = inlined_call_operand.vmem [shape: f32[1,128], index: 3, kind: input, shape index: {}]
  %s4 = inlined_call_operand.hbm [shape: f32[256,128], index: 4, kind: input, shape index: {}]
  %s5 = inlined_call_operand.vmem [shape: f32[1,128], index: 5, kind: input, shape index: {}]
  %s6 = inlined_call_operand.vmem [shape: f32[1,128], index: 6, kind: input, shape index: {}]
  %s7 = inlined_call_operand.hbm [shape: f32[256,256], index: 7, kind: input, shape index: {}]
  %s8 = inlined_call_operand.vmem [shape: f32[1,256], index: 8, kind: input, shape index: {}]
  %s9 = inlined_call_operand.hbm [shape: f32[8,1,256], index: 9, kind: output, shape index: {}]
  %s10 = sld [smem:[#allocation0]]
  $region89: #{tpu_custom_call.1} parent=0
    _
  %s12 = ssub.s32 1, %s10
  %s13 = scalar_select 0, %s12, %s10
  $region1: #{tpu_custom_call.1} parent=0
    #allocation2 [shape = 'u8[524288]{0}', space=vmem, size = 0x80000, scoped, tag = 'input window, operand 0']
    #allocation3 [shape = 's32[2]{0}', space=sflag, size = 0x8, scoped, tag = 'scoped memory for tpu_custom_call.1']
    #allocation4 [shape = 's32[2]{0}', space=sflag, size = 0x8, scoped, tag = 'scoped memory for tpu_custom_call.1']
    #allocation5 [shape = 'u8[8192]{0}', space=vmem, size = 0x2000, scoped, tag = 'input window, operand 1']
    #allocation6 [shape = 's32[2]{0}', space=sflag, size = 0x8, scoped, tag = 'scoped memory for tpu_custom_call.1']
    #allocation7 [shape = 'u8[131072]{0}', space=vmem, size = 0x20000, scoped, tag = 'input window, operand 2, single buffered']
    #allocation8 [shape = 'u8[131072]{0}', space=vmem, size = 0x20000, scoped, tag = 'input window, operand 4, single buffered']
    #allocation9 [shape = 's32[1]{0}', space=sflag, size = 0x4, scoped, tag = 'scoped memory for tpu_custom_call.1']
    #allocation10 [shape = 'u8[262144]{0}', space=vmem, size = 0x40000, scoped, tag = 'input window, operand 7, single buffered']
    #allocation11 [shape = 'u8[8192]{0}', space=vmem, size = 0x2000, scoped, tag = 'output window, operand 0']
    %14 = vsyncpa [#allocation3], 0
    %s15 = scalar_lea.sflag [#allocation3], 1
    %16 = vsyncpa %s15, 0
    %17 = vsyncpa [#allocation6], 0
    %s18 = scalar_lea.sflag [#allocation6], 1
    %19 = vsyncpa %s18, 0
    %20 = vsyncpa [#allocation9], 0
    %21 = vsyncpa [#allocation4], 0
    %s22 = scalar_lea.sflag [#allocation4], 1
    %23 = vsyncpa %s22, 0
    loop: start=0, step=1, limit=4
    $region2: #{tpu_custom_call.1} parent=1 // loop_pre_header
      _
    $region3: #{tpu_custom_call.1} parent=1 // loop_header
      %s25 = sphi 0, %s29
      %p26 = scmp.ge.s32.totalorder %s25, 4
      %s35 = sphi 0, %s37
      %s38 = sphi 0, %s35
      %s39 = sphi 0, %s38
      %s55 = sphi 0, %s39
      %s61 = sphi 0, %s63
      %s64 = sphi 0, %s61
      %s65 = sphi 0, %s64
      %s81 = sphi 0, %s65
      %s85 = sphi 0, %s85
      %s87 = sphi 0, %s85
      %s88 = sphi 0, %s87
      %s102 = sphi 0, %s88
      %s106 = sphi 0, %s106
      %s108 = sphi 0, %s106
      %s109 = sphi 0, %s108
      %s123 = sphi 0, %s109
      %s127 = sphi 0, %s127
      %s129 = sphi 0, %s127
      %s130 = sphi 0, %s129
      %s144 = sphi 0, %s130
      %s148 = sphi 0, %s148
      %s150 = sphi 0, %s148
      %s151 = sphi 0, %s150
      %s165 = sphi 0, %s151
      %s169 = sphi 0, %s169
      %s171 = sphi 0, %s169
      %s172 = sphi 0, %s171
      %s186 = sphi 0, %s172
      %s190 = sphi 0, %s190
      %s192 = sphi 0, %s190
      %s193 = sphi 0, %s192
      %s207 = sphi 0, %s193
      %s211 = sphi 0, %s211
      %s213 = sphi 0, %s211
      %s214 = sphi 0, %s213
      %s228 = sphi 0, %s214
      %s234 = sphi 0, %s236
      %s237 = sphi 0, %s234
      %s238 = sphi 0, %s237
      %s254 = sphi 0, %s238
    $region4: #{tpu_custom_call.1} parent=1 // loop_header_branch
      %28 = sbr.rel (%p26) target = $region8
    $region5: #{tpu_custom_call.1} parent=1 // loop_body
      %s30 = ssub.s32 %s25, 1
      %s31 = ssub.s32 %s25, 2
      %s32 = sadd.s32 %s25, 1
      %s33 = ssub.s32 %s25, %s32
      %p34 = scmp.eq.s32.totalorder %s33, 0
      %s36 = sadd.s32 %s35, 1
      %s37 = scalar_select %p34, %s35, %s36
      %p40 = pneg %p34
      %p41 = scmp.eq.s32.totalorder %s25, 1
      %p42 = por %p40, %p41
      %p43 = scmp.ne.s32.totalorder %s35, %s38
      %p44 = scmp.eq.s32.totalorder %s25, 0
      %p45 = por %p43, %p44
      %p46 = scmp.ne.s32.totalorder %s35, %s38
      %p47 = scmp.eq.s32.totalorder %s30, 1
      %p48 = por %p46, %p47
      %p49 = scmp.ne.s32.totalorder %s38, %s39
      %p50 = scmp.eq.s32.totalorder %s30, 0
      %p51 = por %p49, %p50
      %p52 = scmp.ne.s32.totalorder %s38, %s39
      %p53 = scmp.eq.s32.totalorder %s31, 1
      %p54 = por %p52, %p53
      %p56 = scmp.ne.s32.totalorder %s39, %s55
      %p57 = scmp.eq.s32.totalorder %s31, 0
      %p58 = por %p56, %p57
      %s59 = ssub.s32 %s25, %s32
      %p60 = scmp.eq.s32.totalorder %s59, 0
      %s62 = sadd.s32 %s61, 1
      %s63 = scalar_select %p60, %s61, %s62
      %p66 = pneg %p60
      %p67 = scmp.eq.s32.totalorder %s25, 1
      %p68 = por %p66, %p67
      %p69 = scmp.ne.s32.totalorder %s61, %s64
      %p70 = scmp.eq.s32.totalorder %s25, 0
      %p71 = por %p69, %p70
      %p72 = scmp.ne.s32.totalorder %s61, %s64
      %p73 = scmp.eq.s32.totalorder %s30, 1
      %p74 = por %p72, %p73
      %p75 = scmp.ne.s32.totalorder %s64, %s65
      %p76 = scmp.eq.s32.totalorder %s30, 0
      %p77 = por %p75, %p76
      %p78 = scmp.ne.s32.totalorder %s64, %s65
      %p79 = scmp.eq.s32.totalorder %s31, 1
      %p80 = por %p78, %p79
      %p82 = scmp.ne.s32.totalorder %s65, %s81
      %p83 = scmp.eq.s32.totalorder %s31, 0
      %p84 = por %p82, %p83
      %s86 = sadd.s32 %s85, 1
      %p89 = scmp.eq.s32.totalorder %s25, 1
      %p90 = scmp.ne.s32.totalorder %s85, %s87
      %p91 = scmp.eq.s32.totalorder %s25, 0
      %p92 = por %p90, %p91
      %p93 = scmp.ne.s32.totalorder %s85, %s87
      %p94 = scmp.eq.s32.totalorder %s30, 1
      %p95 = por %p93, %p94
      %p96 = scmp.ne.s32.totalorder %s87, %s88
      %p97 = scmp.eq.s32.totalorder %s30, 0
      %p98 = por %p96, %p97
      %p99 = scmp.ne.s32.totalorder %s87, %s88
      %p100 = scmp.eq.s32.totalorder %s31, 1
      %p101 = por %p99, %p100
      %p103 = scmp.ne.s32.totalorder %s88, %s102
      %p104 = scmp.eq.s32.totalorder %s31, 0
      %p105 = por %p103, %p104
      %s107 = sadd.s32 %s106, 1
      %p110 = scmp.eq.s32.totalorder %s25, 1
      %p111 = scmp.ne.s32.totalorder %s106, %s108
      %p112 = scmp.eq.s32.totalorder %s25, 0
      %p113 = por %p111, %p112
      %p114 = scmp.ne.s32.totalorder %s106, %s108
      %p115 = scmp.eq.s32.totalorder %s30, 1
      %p116 = por %p114, %p115
      %p117 = scmp.ne.s32.totalorder %s108, %s109
      %p118 = scmp.eq.s32.totalorder %s30, 0
      %p119 = por %p117, %p118
      %p120 = scmp.ne.s32.totalorder %s108, %s109
      %p121 = scmp.eq.s32.totalorder %s31, 1
      %p122 = por %p120, %p121
      %p124 = scmp.ne.s32.totalorder %s109, %s123
      %p125 = scmp.eq.s32.totalorder %s31, 0
      %p126 = por %p124, %p125
      %s128 = sadd.s32 %s127, 1
      %p131 = scmp.eq.s32.totalorder %s25, 1
      %p132 = scmp.ne.s32.totalorder %s127, %s129
      %p133 = scmp.eq.s32.totalorder %s25, 0
      %p134 = por %p132, %p133
      %p135 = scmp.ne.s32.totalorder %s127, %s129
      %p136 = scmp.eq.s32.totalorder %s30, 1
      %p137 = por %p135, %p136
      %p138 = scmp.ne.s32.totalorder %s129, %s130
      %p139 = scmp.eq.s32.totalorder %s30, 0
      %p140 = por %p138, %p139
      %p141 = scmp.ne.s32.totalorder %s129, %s130
      %p142 = scmp.eq.s32.totalorder %s31, 1
      %p143 = por %p141, %p142
      %p145 = scmp.ne.s32.totalorder %s130, %s144
      %p146 = scmp.eq.s32.totalorder %s31, 0
      %p147 = por %p145, %p146
      %s149 = sadd.s32 %s148, 1
      %p152 = scmp.eq.s32.totalorder %s25, 1
      %p153 = scmp.ne.s32.totalorder %s148, %s150
      %p154 = scmp.eq.s32.totalorder %s25, 0
      %p155 = por %p153, %p154
      %p156 = scmp.ne.s32.totalorder %s148, %s150
      %p157 = scmp.eq.s32.totalorder %s30, 1
      %p158 = por %p156, %p157
      %p159 = scmp.ne.s32.totalorder %s150, %s151
      %p160 = scmp.eq.s32.totalorder %s30, 0
      %p161 = por %p159, %p160
      %p162 = scmp.ne.s32.totalorder %s150, %s151
      %p163 = scmp.eq.s32.totalorder %s31, 1
      %p164 = por %p162, %p163
      %p166 = scmp.ne.s32.totalorder %s151, %s165
      %p167 = scmp.eq.s32.totalorder %s31, 0
      %p168 = por %p166, %p167
      %s170 = sadd.s32 %s169, 1
      %p173 = scmp.eq.s32.totalorder %s25, 1
      %p174 = scmp.ne.s32.totalorder %s169, %s171
      %p175 = scmp.eq.s32.totalorder %s25, 0
      %p176 = por %p174, %p175
      %p177 = scmp.ne.s32.totalorder %s169, %s171
      %p178 = scmp.eq.s32.totalorder %s30, 1
      %p179 = por %p177, %p178
      %p180 = scmp.ne.s32.totalorder %s171, %s172
      %p181 = scmp.eq.s32.totalorder %s30, 0
      %p182 = por %p180, %p181
      %p183 = scmp.ne.s32.totalorder %s171, %s172
      %p184 = scmp.eq.s32.totalorder %s31, 1
      %p185 = por %p183, %p184
      %p187 = scmp.ne.s32.totalorder %s172, %s186
      %p188 = scmp.eq.s32.totalorder %s31, 0
      %p189 = por %p187, %p188
      %s191 = sadd.s32 %s190, 1
      %p194 = scmp.eq.s32.totalorder %s25, 1
      %p195 = scmp.ne.s32.totalorder %s190, %s192
      %p196 = scmp.eq.s32.totalorder %s25, 0
      %p197 = por %p195, %p196
      %p198 = scmp.ne.s32.totalorder %s190, %s192
      %p199 = scmp.eq.s32.totalorder %s30, 1
      %p200 = por %p198, %p199
      %p201 = scmp.ne.s32.totalorder %s192, %s193
      %p202 = scmp.eq.s32.totalorder %s30, 0
      %p203 = por %p201, %p202
      %p204 = scmp.ne.s32.totalorder %s192, %s193
      %p205 = scmp.eq.s32.totalorder %s31, 1
      %p206 = por %p204, %p205
      %p208 = scmp.ne.s32.totalorder %s193, %s207
      %p209 = scmp.eq.s32.totalorder %s31, 0
      %p210 = por %p208, %p209
      %s212 = sadd.s32 %s211, 1
      %p215 = scmp.eq.s32.totalorder %s25, 1
      %p216 = scmp.ne.s32.totalorder %s211, %s213
      %p217 = scmp.eq.s32.totalorder %s25, 0
      %p218 = por %p216, %p217
      %p219 = scmp.ne.s32.totalorder %s211, %s213
      %p220 = scmp.eq.s32.totalorder %s30, 1
      %p221 = por %p219, %p220
      %p222 = scmp.ne.s32.totalorder %s213, %s214
      %p223 = scmp.eq.s32.totalorder %s30, 0
      %p224 = por %p222, %p223
      %p225 = scmp.ne.s32.totalorder %s213, %s214
      %p226 = scmp.eq.s32.totalorder %s31, 1
      %p227 = por %p225, %p226
      %p229 = scmp.ne.s32.totalorder %s214, %s228
      %p230 = scmp.eq.s32.totalorder %s31, 0
      %p231 = por %p229, %p230
      %s232 = ssub.s32 %s25, %s32
      %p233 = scmp.eq.s32.totalorder %s232, 0
      %s235 = sadd.s32 %s234, 1
      %s236 = scalar_select %p233, %s234, %s235
      %p239 = pneg %p233
      %p240 = scmp.eq.s32.totalorder %s25, 1
      %p241 = por %p239, %p240
      %p242 = scmp.ne.s32.totalorder %s234, %s237
      %p243 = scmp.eq.s32.totalorder %s25, 0
      %p244 = por %p242, %p243
      %p245 = scmp.ne.s32.totalorder %s234, %s237
      %p246 = scmp.eq.s32.totalorder %s30, 1
      %p247 = por %p245, %p246
      %p248 = scmp.ne.s32.totalorder %s237, %s238
      %p249 = scmp.eq.s32.totalorder %s30, 0
      %p250 = por %p248, %p249
      %p251 = scmp.ne.s32.totalorder %s237, %s238
      %p252 = scmp.eq.s32.totalorder %s31, 1
      %p253 = por %p251, %p252
      %p255 = scmp.ne.s32.totalorder %s238, %s254
      %p256 = scmp.eq.s32.totalorder %s31, 0
      %p257 = por %p255, %p256
      %p258 = scmp.le.s32.totalorder 1, %s25
      %p259 = scmp.lt.s32.totalorder %s25, 3
      %p260 = pnand %p258, %p259
      %p261 = pneg %p260
      // Predicated region
      $region9: #{tpu_custom_call.1} parent=5 // pred_check
        _
      $region10: #{tpu_custom_call.1} parent=5 // pred_check_branch
        %263 = sbr.rel (%p260) target = $region12
      $region11: #{tpu_custom_call.1} parent=5 // pred_region
        %s264 = ssub.s32 %s25, 1
        // Predicated region
        $region13: #{tpu_custom_call.1} parent=11 // pred_check
          %p265 = pneg %p98
        $region14: #{tpu_custom_call.1} parent=11 // pred_check_branch
          %267 = sbr.rel (%p265) target = $region16
        $region15: #{tpu_custom_call.1} parent=11 // pred_region
          %269 = vsyncadd [#allocation6], 0
          %s270 = sshll.u32 %s2, 4
          %s271 = int_to_ptr.hbm [resolvable:$true] %s270
          %s272 = sshll.u32 [#allocation7], 4
          %s273 = int_to_ptr.vmem [resolvable:$true] %s272
          %278 = dma.hbm_to_vmem [thread:$0]  %s271, 4096, %s273, [#allocation6], 128, 128, 8
        $region16: #{tpu_custom_call.1} parent=11 // pred_fallthru
          _
        // Predicated region
        $region17: #{tpu_custom_call.1} parent=11 // pred_check
          %p279 = pneg %p119
        $region18: #{tpu_custom_call.1} parent=11 // pred_check_branch
          %281 = sbr.rel (%p279) target = $region20
        $region19: #{tpu_custom_call.1} parent=11 // pred_region
          _
        $region20: #{tpu_custom_call.1} parent=11 // pred_fallthru
          _
        // Predicated region
        $region21: #{tpu_custom_call.1} parent=11 // pred_check
          %p282 = pneg %p140
        $region22: #{tpu_custom_call.1} parent=11 // pred_check_branch
          %284 = sbr.rel (%p282) target = $region24
        $region23: #{tpu_custom_call.1} parent=11 // pred_region
          %286 = vsyncadd [#allocation9], 0
          %s287 = sshll.u32 %s4, 4
          %s288 = int_to_ptr.hbm [resolvable:$true] %s287
          %s289 = sshll.u32 [#allocation8], 4
          %s290 = int_to_ptr.vmem [resolvable:$true] %s289
          %295 = dma.hbm_to_vmem [thread:$0]  %s288, 4096, %s290, [#allocation9], 128, 128, 8
        $region24: #{tpu_custom_call.1} parent=11 // pred_fallthru
          _
        // Predicated region
        $region25: #{tpu_custom_call.1} parent=11 // pred_check
          %p296 = pneg %p161
        $region26: #{tpu_custom_call.1} parent=11 // pred_check_branch
          %298 = sbr.rel (%p296) target = $region28
        $region27: #{tpu_custom_call.1} parent=11 // pred_region
          _
        $region28: #{tpu_custom_call.1} parent=11 // pred_fallthru
          _
        // Predicated region
        $region29: #{tpu_custom_call.1} parent=11 // pred_check
          %p299 = pneg %p182
        $region30: #{tpu_custom_call.1} parent=11 // pred_check_branch
          %301 = sbr.rel (%p299) target = $region32
        $region31: #{tpu_custom_call.1} parent=11 // pred_region
          _
        $region32: #{tpu_custom_call.1} parent=11 // pred_fallthru
          _
        // Predicated region
        $region33: #{tpu_custom_call.1} parent=11 // pred_check
          %p302 = pneg %p203
        $region34: #{tpu_custom_call.1} parent=11 // pred_check_branch
          %304 = sbr.rel (%p302) target = $region36
        $region35: #{tpu_custom_call.1} parent=11 // pred_region
          %306 = vsyncadd [#allocation9], 0
          %s307 = sshll.u32 %s7, 4
          %s308 = int_to_ptr.hbm [resolvable:$true] %s307
          %s309 = sshll.u32 [#allocation10], 4
          %s310 = int_to_ptr.vmem [resolvable:$true] %s309
          %315 = dma.hbm_to_vmem [thread:$0]  %s308, 8192, %s310, [#allocation9], 256, 256, 16
        $region36: #{tpu_custom_call.1} parent=11 // pred_fallthru
          _
        // Predicated region
        $region37: #{tpu_custom_call.1} parent=11 // pred_check
          %p316 = pneg %p224
        $region38: #{tpu_custom_call.1} parent=11 // pred_check_branch
          %318 = sbr.rel (%p316) target = $region40
        $region39: #{tpu_custom_call.1} parent=11 // pred_region
          _
        $region40: #{tpu_custom_call.1} parent=11 // pred_fallthru
          _
      $region12: #{tpu_custom_call.1} parent=5 // pred_fallthru
        _
      %p319 = scmp.lt.s32.totalorder %s25, 2
      // Predicated region
      $region41: #{tpu_custom_call.1} parent=5 // pred_check
        %p320 = pneg %p319
      $region42: #{tpu_custom_call.1} parent=5 // pred_check_branch
        %322 = sbr.rel (%p320) target = $region44
      $region43: #{tpu_custom_call.1} parent=5 // pred_region
        // Predicated region
        $region45: #{tpu_custom_call.1} parent=43 // pred_check
          %p323 = pneg %p45
        $region46: #{tpu_custom_call.1} parent=43 // pred_check_branch
          %325 = sbr.rel (%p323) target = $region48
        $region47: #{tpu_custom_call.1} parent=43 // pred_region
          %s326 = sand.u32 %s35, 1
          %s327 = scalar_lea.sflag [#allocation3], %s326
          %s328 = sand.u32 %s35, 1
          %s329 = smul.addr %s328, 512
          %s330 = scalar_lea.vmem [#allocation2], %s329
          %s331 = smul.u32 4, %s25
          %333 = vsyncadd %s327, 0
          %s334 = smul.addr %s331, 16
          %s335 = smul.addr %s334, 8
          %s336 = scalar_lea.hbm %s0, %s335
          %s337 = sshll.u32 %s336, 4
          %s338 = int_to_ptr.hbm [resolvable:$true] %s337
          %s339 = sshll.u32 %s330, 4
          %s340 = int_to_ptr.vmem [resolvable:$true] %s339
          %345 = dma.hbm_to_vmem [thread:$0]  %s338, 8192, %s340, %s327, 256, 256, 16
        $region48: #{tpu_custom_call.1} parent=43 // pred_fallthru
          _
        // Predicated region
        $region49: #{tpu_custom_call.1} parent=43 // pred_check
          %p346 = pneg %p71
        $region50: #{tpu_custom_call.1} parent=43 // pred_check_branch
          %348 = sbr.rel (%p346) target = $region52
        $region51: #{tpu_custom_call.1} parent=43 // pred_region
          %s349 = sand.u32 %s25, 1
          %s350 = scalar_lea.sflag [#allocation6], %s349
          %s351 = sand.u32 %s61, 1
          %s352 = smul.addr %s351, 8
          %s353 = scalar_lea.vmem [#allocation5], %s352
          %s354 = smul.u32 4, %s25
          %356 = vsyncadd %s350, 0
          %s357 = smul.addr %s354, 2
          %s358 = scalar_lea.hbm %s1, %s357
          %s359 = sshll.u32 %s358, 4
          %s360 = int_to_ptr.hbm [resolvable:$true] %s359
          %s361 = sshll.u32 %s353, 4
          %s362 = int_to_ptr.vmem [resolvable:$true] %s361
          %367 = dma.hbm_to_vmem [thread:$0]  %s360, 128, %s362, %s350, 32, 32, 2
        $region52: #{tpu_custom_call.1} parent=43 // pred_fallthru
          _
      $region44: #{tpu_custom_call.1} parent=5 // pred_fallthru
        _
      %p368 = scmp.le.s32.totalorder 1, %s25
      %p369 = scmp.lt.s32.totalorder %s25, 3
      %p370 = pnand %p368, %p369
      %p371 = pneg %p370
      // Predicated region
      $region53: #{tpu_custom_call.1} parent=5 // pred_check
        _
      $region54: #{tpu_custom_call.1} parent=5 // pred_check_branch
        %373 = sbr.rel (%p370) target = $region56
      $region55: #{tpu_custom_call.1} parent=5 // pred_region
        %s374 = ssub.s32 %s25, 1
        %s375 = sand.u32 %s38, 1
        %s376 = scalar_lea.sflag [#allocation3], %s375
        %s377 = sand.u32 %s38, 1
        %s378 = smul.addr %s377, 512
        %s379 = scalar_lea.vmem [#allocation2], %s378
        // Predicated region
        $region57: #{tpu_custom_call.1} parent=55 // pred_check
          %p380 = pneg %p51
        $region58: #{tpu_custom_call.1} parent=55 // pred_check_branch
          %382 = sbr.rel (%p380) target = $region60
        $region59: #{tpu_custom_call.1} parent=55 // pred_region
          %384 = dma.done %s376, 8192
        $region60: #{tpu_custom_call.1} parent=55 // pred_fallthru
          _
        %s385 = sand.u32 %s30, 1
        %s386 = scalar_lea.sflag [#allocation6], %s385
        %s387 = sand.u32 %s64, 1
        %s388 = smul.addr %s387, 8
        %s389 = scalar_lea.vmem [#allocation5], %s388
        // Predicated region
        $region61: #{tpu_custom_call.1} parent=55 // pred_check
          %p390 = pneg %p77
        $region62: #{tpu_custom_call.1} parent=55 // pred_check_branch
          %392 = sbr.rel (%p390) target = $region64
        $region63: #{tpu_custom_call.1} parent=55 // pred_region
          %394 = dma.done %s386, 128
        $region64: #{tpu_custom_call.1} parent=55 // pred_fallthru
          _
        // Predicated region
        $region65: #{tpu_custom_call.1} parent=55 // pred_check
          %p395 = pneg %p98
        $region66: #{tpu_custom_call.1} parent=55 // pred_check_branch
          %397 = sbr.rel (%p395) target = $region68
        $region67: #{tpu_custom_call.1} parent=55 // pred_region
          %399 = dma.done [#allocation6], 4096
        $region68: #{tpu_custom_call.1} parent=55 // pred_fallthru
          _
        // Predicated region
        $region69: #{tpu_custom_call.1} parent=55 // pred_check
          %p400 = pneg %p140
        $region70: #{tpu_custom_call.1} parent=55 // pred_check_branch
          %402 = sbr.rel (%p400) target = $region72
        $region71: #{tpu_custom_call.1} parent=55 // pred_region
          %404 = dma.done [#allocation9], 4096
        $region72: #{tpu_custom_call.1} parent=55 // pred_fallthru
          _
        // Predicated region
        $region73: #{tpu_custom_call.1} parent=55 // pred_check
          %p405 = pneg %p203
        $region74: #{tpu_custom_call.1} parent=55 // pred_check_branch
          %407 = sbr.rel (%p405) target = $region76
        $region75: #{tpu_custom_call.1} parent=55 // pred_region
          %409 = dma.done [#allocation9], 8192
        $region76: #{tpu_custom_call.1} parent=55 // pred_fallthru
          _
        %s410 = sand.u32 %s38, 1
        %s411 = scalar_lea.sflag [#allocation3], %s410
        %s412 = sand.u32 %s38, 1
        %s413 = smul.addr %s412, 512
        %s414 = scalar_lea.vmem [#allocation2], %s413
        %p415 = pneg %p51
        %p416 = pneg %p48
        %s417 = sand.u32 %s30, 1
        %s418 = scalar_lea.sflag [#allocation6], %s417
        %s419 = sand.u32 %s64, 1
        %s420 = smul.addr %s419, 8
        %s421 = scalar_lea.vmem [#allocation5], %s420
        %p422 = pneg %p77
        %p423 = pneg %p74
        %p424 = pneg %p98
        %p425 = pneg %p95
        %p426 = pneg %p119
        %p427 = pneg %p116
        %p428 = pneg %p140
        %p429 = pneg %p137
        %p430 = pneg %p161
        %p431 = pneg %p158
        %p432 = pneg %p182
        %p433 = pneg %p179
        %p434 = pneg %p203
        %p435 = pneg %p200
        %p436 = pneg %p224
        %p437 = pneg %p221
        %p438 = pneg %p250
        %p439 = pneg %p247
        %s440 = sand.u32 %s237, 1
        %s441 = scalar_lea.sflag [#allocation4], %s440
        %s442 = sand.u32 %s237, 1
        %s443 = smul.addr %s442, 8
        %s444 = scalar_lea.vmem [#allocation11], %s443
        %s445 = smul.u32 4, %s30
        %s446 = smul.u32 4, %s30
        %s447 = smul.u32 4, %s30
        %v448 = vld [vmem:[%s379] sm:$0xff]
        %v449 = vld [vmem:[%s379 + $0x8] sm:$0xff]
        %v450 = vld [vmem:[%s379 + $0x10] sm:$0xff]
        %v451 = vld [vmem:[%s379 + $0x18] sm:$0xff]
        %v452 = vld [vmem:[%s379 + $0x20] sm:$0xff]
        %v453 = vld [vmem:[%s379 + $0x28] sm:$0xff]
        %v454 = vld [vmem:[%s379 + $0x30] sm:$0xff]
        %v455 = vld [vmem:[%s379 + $0x38] sm:$0xff]
        %v456 = vld [vmem:[%s379 + $0x40] sm:$0xff]
        %v457 = vld [vmem:[%s379 + $0x48] sm:$0xff]
        %v458 = vld [vmem:[%s379 + $0x50] sm:$0xff]
        %v459 = vld [vmem:[%s379 + $0x58] sm:$0xff]
        %v460 = vld [vmem:[%s379 + $0x60] sm:$0xff]
        %v461 = vld [vmem:[%s379 + $0x68] sm:$0xff]
        %v462 = vld [vmem:[%s379 + $0x70] sm:$0xff]
        %v463 = vld [vmem:[%s379 + $0x78] sm:$0xff]
        %v464 = vld [vmem:[%s379 + $0x80] sm:$0xff]
        %v465 = vld [vmem:[%s379 + $0x88] sm:$0xff]
        %v466 = vld [vmem:[%s379 + $0x90] sm:$0xff]
        %v467 = vld [vmem:[%s379 + $0x98] sm:$0xff]
        %v468 = vld [vmem:[%s379 + $0xa0] sm:$0xff]
        %v469 = vld [vmem:[%s379 + $0xa8] sm:$0xff]
        %v470 = vld [vmem:[%s379 + $0xb0] sm:$0xff]
        %v471 = vld [vmem:[%s379 + $0xb8] sm:$0xff]
        %v472 = vld [vmem:[%s379 + $0xc0] sm:$0xff]
        %v473 = vld [vmem:[%s379 + $0xc8] sm:$0xff]
        %v474 = vld [vmem:[%s379 + $0xd0] sm:$0xff]
        %v475 = vld [vmem:[%s379 + $0xd8] sm:$0xff]
        %v476 = vld [vmem:[%s379 + $0xe0] sm:$0xff]
        %v477 = vld [vmem:[%s379 + $0xe8] sm:$0xff]
        %v478 = vld [vmem:[%s379 + $0xf0] sm:$0xff]
        %v479 = vld [vmem:[%s379 + $0xf8] sm:$0xff]
        %v480 = vld [vmem:[%s379 + $0x100] sm:$0xff]
        %v481 = vld [vmem:[%s379 + $0x108] sm:$0xff]
        %v482 = vld [vmem:[%s379 + $0x110] sm:$0xff]
        %v483 = vld [vmem:[%s379 + $0x118] sm:$0xff]
        %v484 = vld [vmem:[%s379 + $0x120] sm:$0xff]
        %v485 = vld [vmem:[%s379 + $0x128] sm:$0xff]
        %v486 = vld [vmem:[%s379 + $0x130] sm:$0xff]
        %v487 = vld [vmem:[%s379 + $0x138] sm:$0xff]
        %v488 = vld [vmem:[%s379 + $0x140] sm:$0xff]
        %v489 = vld [vmem:[%s379 + $0x148] sm:$0xff]
        %v490 = vld [vmem:[%s379 + $0x150] sm:$0xff]
        %v491 = vld [vmem:[%s379 + $0x158] sm:$0xff]
        %v492 = vld [vmem:[%s379 + $0x160] sm:$0xff]
        %v493 = vld [vmem:[%s379 + $0x168] sm:$0xff]
        %v494 = vld [vmem:[%s379 + $0x170] sm:$0xff]
        %v495 = vld [vmem:[%s379 + $0x178] sm:$0xff]
        %v496 = vld [vmem:[%s379 + $0x180] sm:$0xff]
        %v497 = vld [vmem:[%s379 + $0x188] sm:$0xff]
        %v498 = vld [vmem:[%s379 + $0x190] sm:$0xff]
        %v499 = vld [vmem:[%s379 + $0x198] sm:$0xff]
        %v500 = vld [vmem:[%s379 + $0x1a0] sm:$0xff]
        %v501 = vld [vmem:[%s379 + $0x1a8] sm:$0xff]
        %v502 = vld [vmem:[%s379 + $0x1b0] sm:$0xff]
        %v503 = vld [vmem:[%s379 + $0x1b8] sm:$0xff]
        %v504 = vld [vmem:[%s379 + $0x1c0] sm:$0xff]
        %v505 = vld [vmem:[%s379 + $0x1c8] sm:$0xff]
        %v506 = vld [vmem:[%s379 + $0x1d0] sm:$0xff]
        %v507 = vld [vmem:[%s379 + $0x1d8] sm:$0xff]
        %v508 = vld [vmem:[%s379 + $0x1e0] sm:$0xff]
        %v509 = vld [vmem:[%s379 + $0x1e8] sm:$0xff]
        %v510 = vld [vmem:[%s379 + $0x1f0] sm:$0xff]
        %v511 = vld [vmem:[%s379 + $0x1f8] sm:$0xff]
        %v512 = vld [vmem:[%s389] sm:$0x3]
        %v513 = vld [vmem:[%s389 + $0x2] sm:$0x3]
        %v514 = vld [vmem:[%s389 + $0x4] sm:$0x3]
        %v515 = vld [vmem:[%s389 + $0x6] sm:$0x3]
        %v516 = vld [vmem:[#allocation7] sm:$0xff]
        %v517 = vld [vmem:[#allocation7 + $0x8] sm:$0xff]
        %v518 = vld [vmem:[#allocation7 + $0x10] sm:$0xff]
        %v519 = vld [vmem:[#allocation7 + $0x18] sm:$0xff]
        %v520 = vld [vmem:[#allocation7 + $0x20] sm:$0xff]
        %v521 = vld [vmem:[#allocation7 + $0x28] sm:$0xff]
        %v522 = vld [vmem:[#allocation7 + $0x30] sm:$0xff]
        %v523 = vld [vmem:[#allocation7 + $0x38] sm:$0xff]
        %v524 = vld [vmem:[#allocation7 + $0x40] sm:$0xff]
        %v525 = vld [vmem:[#allocation7 + $0x48] sm:$0xff]
        %v526 = vld [vmem:[#allocation7 + $0x50] sm:$0xff]
        %v527 = vld [vmem:[#allocation7 + $0x58] sm:$0xff]
        %v528 = vld [vmem:[#allocation7 + $0x60] sm:$0xff]
        %v529 = vld [vmem:[#allocation7 + $0x68] sm:$0xff]
        %v530 = vld [vmem:[#allocation7 + $0x70] sm:$0xff]
        %v531 = vld [vmem:[#allocation7 + $0x78] sm:$0xff]
        %v532 = vld [vmem:[#allocation7 + $0x80] sm:$0xff]
        %v533 = vld [vmem:[#allocation7 + $0x88] sm:$0xff]
        %v534 = vld [vmem:[#allocation7 + $0x90] sm:$0xff]
        %v535 = vld [vmem:[#allocation7 + $0x98] sm:$0xff]
        %v536 = vld [vmem:[#allocation7 + $0xa0] sm:$0xff]
        %v537 = vld [vmem:[#allocation7 + $0xa8] sm:$0xff]
        %v538 = vld [vmem:[#allocation7 + $0xb0] sm:$0xff]
        %v539 = vld [vmem:[#allocation7 + $0xb8] sm:$0xff]
        %v540 = vld [vmem:[#allocation7 + $0xc0] sm:$0xff]
        %v541 = vld [vmem:[#allocation7 + $0xc8] sm:$0xff]
        %v542 = vld [vmem:[#allocation7 + $0xd0] sm:$0xff]
        %v543 = vld [vmem:[#allocation7 + $0xd8] sm:$0xff]
        %v544 = vld [vmem:[#allocation7 + $0xe0] sm:$0xff]
        %v545 = vld [vmem:[#allocation7 + $0xe8] sm:$0xff]
        %v546 = vld [vmem:[#allocation7 + $0xf0] sm:$0xff]
        %v547 = vld [vmem:[#allocation7 + $0xf8] sm:$0xff]
        %v548 = vld [vmem:[%s3] sm:$0x1]
        %v550 = vperm.slane %v548, 0
        %552 = vmatpush.msra.mxu0 %v531
        %553 = vmatpush.msra.mxu0 %v530
        %554 = vmatpush.msra.mxu0 %v529
        %555 = vmatpush.msra.mxu0 %v528
        %556 = vmatpush.msra.mxu0 %v527
        %557 = vmatpush.msra.mxu0 %v526
        %558 = vmatpush.msra.mxu0 %v525
        %559 = vmatpush.msra.mxu0 %v524
        %560 = vmatpush.msra.mxu0 %v523
        %561 = vmatpush.msra.mxu0 %v522
        %562 = vmatpush.msra.mxu0 %v521
        %563 = vmatpush.msra.mxu0 %v520
        %564 = vmatpush.msra.mxu0 %v519
        %565 = vmatpush.msra.mxu0 %v518
        %566 = vmatpush.msra.mxu0 %v517
        %567 = vmatpush.msra.mxu0 %v516
        %568 = vmatmul.f32.gmra.mxu0 %v448
        %v569 = vpop.f32.mrf.mxu0
        %v570 = vadd.f32 %v550, %v569
        %571 = vmatmul.f32.gmra.mxu0 %v450
        %v572 = vpop.f32.mrf.mxu0
        %v573 = vadd.f32 %v550, %v572
        %574 = vmatmul.f32.gmra.mxu0 %v452
        %v575 = vpop.f32.mrf.mxu0
        %v576 = vadd.f32 %v550, %v575
        %577 = vmatmul.f32.gmra.mxu0 %v454
        %v578 = vpop.f32.mrf.mxu0
        %v579 = vadd.f32 %v550, %v578
        %580 = vmatmul.f32.gmra.mxu0 %v456
        %v581 = vpop.f32.mrf.mxu0
        %v582 = vadd.f32 %v550, %v581
        %583 = vmatmul.f32.gmra.mxu0 %v458
        %v584 = vpop.f32.mrf.mxu0
        %v585 = vadd.f32 %v550, %v584
        %586 = vmatmul.f32.gmra.mxu0 %v460
        %v587 = vpop.f32.mrf.mxu0
        %v588 = vadd.f32 %v550, %v587
        %589 = vmatmul.f32.gmra.mxu0 %v462
        %v590 = vpop.f32.mrf.mxu0
        %v591 = vadd.f32 %v550, %v590
        %592 = vmatmul.f32.gmra.mxu0 %v464
        %v593 = vpop.f32.mrf.mxu0
        %v594 = vadd.f32 %v550, %v593
        %595 = vmatmul.f32.gmra.mxu0 %v466
        %v596 = vpop.f32.mrf.mxu0
        %v597 = vadd.f32 %v550, %v596
        %598 = vmatmul.f32.gmra.mxu0 %v468
        %v599 = vpop.f32.mrf.mxu0
        %v600 = vadd.f32 %v550, %v599
        %601 = vmatmul.f32.gmra.mxu0 %v470
        %v602 = vpop.f32.mrf.mxu0
        %v603 = vadd.f32 %v550, %v602
        %604 = vmatmul.f32.gmra.mxu0 %v472
        %v605 = vpop.f32.mrf.mxu0
        %v606 = vadd.f32 %v550, %v605
        %607 = vmatmul.f32.gmra.mxu0 %v474
        %v608 = vpop.f32.mrf.mxu0
        %v609 = vadd.f32 %v550, %v608
        %610 = vmatmul.f32.gmra.mxu0 %v476
        %v611 = vpop.f32.mrf.mxu0
        %v612 = vadd.f32 %v550, %v611
        %613 = vmatmul.f32.gmra.mxu0 %v478
        %v614 = vpop.f32.mrf.mxu0
        %v615 = vadd.f32 %v550, %v614
        %616 = vmatmul.f32.gmra.mxu0 %v480
        %v617 = vpop.f32.mrf.mxu0
        %v618 = vadd.f32 %v550, %v617
        %619 = vmatmul.f32.gmra.mxu0 %v482
        %v620 = vpop.f32.mrf.mxu0
        %v621 = vadd.f32 %v550, %v620
        %622 = vmatmul.f32.gmra.mxu0 %v484
        %v623 = vpop.f32.mrf.mxu0
        %v624 = vadd.f32 %v550, %v623
        %625 = vmatmul.f32.gmra.mxu0 %v486
        %v626 = vpop.f32.mrf.mxu0
        %v627 = vadd.f32 %v550, %v626
        %628 = vmatmul.f32.gmra.mxu0 %v488
        %v629 = vpop.f32.mrf.mxu0
        %v630 = vadd.f32 %v550, %v629
        %631 = vmatmul.f32.gmra.mxu0 %v490
        %v632 = vpop.f32.mrf.mxu0
        %v633 = vadd.f32 %v550, %v632
        %634 = vmatmul.f32.gmra.mxu0 %v492
        %v635 = vpop.f32.mrf.mxu0
        %v636 = vadd.f32 %v550, %v635
        %637 = vmatmul.f32.gmra.mxu0 %v494
        %v638 = vpop.f32.mrf.mxu0
        %v639 = vadd.f32 %v550, %v638
        %640 = vmatmul.f32.gmra.mxu0 %v496
        %v641 = vpop.f32.mrf.mxu0
        %v642 = vadd.f32 %v550, %v641
        %643 = vmatmul.f32.gmra.mxu0 %v498
        %v644 = vpop.f32.mrf.mxu0
        %v645 = vadd.f32 %v550, %v644
        %646 = vmatmul.f32.gmra.mxu0 %v500
        %v647 = vpop.f32.mrf.mxu0
        %v648 = vadd.f32 %v550, %v647
        %649 = vmatmul.f32.gmra.mxu0 %v502
        %v650 = vpop.f32.mrf.mxu0
        %v651 = vadd.f32 %v550, %v650
        %652 = vmatmul.f32.gmra.mxu0 %v504
        %v653 = vpop.f32.mrf.mxu0
        %v654 = vadd.f32 %v550, %v653
        %655 = vmatmul.f32.gmra.mxu0 %v506
        %v656 = vpop.f32.mrf.mxu0
        %v657 = vadd.f32 %v550, %v656
        %658 = vmatmul.f32.gmra.mxu0 %v508
        %v659 = vpop.f32.mrf.mxu0
        %v660 = vadd.f32 %v550, %v659
        %661 = vmatmul.f32.gmra.mxu0 %v510
        %v662 = vpop.f32.mrf.mxu0
        %v663 = vadd.f32 %v550, %v662
        %664 = vdwg.mxu0
        %665 = vmatpush.msra.mxu0 %v547
        %666 = vmatpush.msra.mxu0 %v546
        %667 = vmatpush.msra.mxu0 %v545
        %668 = vmatpush.msra.mxu0 %v544
        %669 = vmatpush.msra.mxu0 %v543
        %670 = vmatpush.msra.mxu0 %v542
        %671 = vmatpush.msra.mxu0 %v541
        %672 = vmatpush.msra.mxu0 %v540
        %673 = vmatpush.msra.mxu0 %v539
        %674 = vmatpush.msra.mxu0 %v538
        %675 = vmatpush.msra.mxu0 %v537
        %676 = vmatpush.msra.mxu0 %v536
        %677 = vmatpush.msra.mxu0 %v535
        %678 = vmatpush.msra.mxu0 %v534
        %679 = vmatpush.msra.mxu0 %v533
        %680 = vmatpush.msra.mxu0 %v532
        %681 = vmatmul.f32.gmra.mxu0 %v449
        %v682 = vpop.f32.mrf.mxu0
        %v683 = vadd.f32 %v570, %v682
        %684 = vmatmul.f32.gmra.mxu0 %v451
        %v685 = vpop.f32.mrf.mxu0
        %v686 = vadd.f32 %v573, %v685
        %687 = vmatmul.f32.gmra.mxu0 %v453
        %v688 = vpop.f32.mrf.mxu0
        %v689 = vadd.f32 %v576, %v688
        %690 = vmatmul.f32.gmra.mxu0 %v455
        %v691 = vpop.f32.mrf.mxu0
        %v692 = vadd.f32 %v579, %v691
        %693 = vmatmul.f32.gmra.mxu0 %v457
        %v694 = vpop.f32.mrf.mxu0
        %v695 = vadd.f32 %v582, %v694
        %696 = vmatmul.f32.gmra.mxu0 %v459
        %v697 = vpop.f32.mrf.mxu0
        %v698 = vadd.f32 %v585, %v697
        %699 = vmatmul.f32.gmra.mxu0 %v461
        %v700 = vpop.f32.mrf.mxu0
        %v701 = vadd.f32 %v588, %v700
        %702 = vmatmul.f32.gmra.mxu0 %v463
        %v703 = vpop.f32.mrf.mxu0
        %v704 = vadd.f32 %v591, %v703
        %705 = vmatmul.f32.gmra.mxu0 %v465
        %v706 = vpop.f32.mrf.mxu0
        %v707 = vadd.f32 %v594, %v706
        %708 = vmatmul.f32.gmra.mxu0 %v467
        %v709 = vpop.f32.mrf.mxu0
        %v710 = vadd.f32 %v597, %v709
        %711 = vmatmul.f32.gmra.mxu0 %v469
        %v712 = vpop.f32.mrf.mxu0
        %v713 = vadd.f32 %v600, %v712
        %714 = vmatmul.f32.gmra.mxu0 %v471
        %v715 = vpop.f32.mrf.mxu0
        %v716 = vadd.f32 %v603, %v715
        %717 = vmatmul.f32.gmra.mxu0 %v473
        %v718 = vpop.f32.mrf.mxu0
        %v719 = vadd.f32 %v606, %v718
        %720 = vmatmul.f32.gmra.mxu0 %v475
        %v721 = vpop.f32.mrf.mxu0
        %v722 = vadd.f32 %v609, %v721
        %723 = vmatmul.f32.gmra.mxu0 %v477
        %v724 = vpop.f32.mrf.mxu0
        %v725 = vadd.f32 %v612, %v724
        %726 = vmatmul.f32.gmra.mxu0 %v479
        %v727 = vpop.f32.mrf.mxu0
        %v728 = vadd.f32 %v615, %v727
        %729 = vmatmul.f32.gmra.mxu0 %v481
        %v730 = vpop.f32.mrf.mxu0
        %v731 = vadd.f32 %v618, %v730
        %732 = vmatmul.f32.gmra.mxu0 %v483
        %v733 = vpop.f32.mrf.mxu0
        %v734 = vadd.f32 %v621, %v733
        %735 = vmatmul.f32.gmra.mxu0 %v485
        %v736 = vpop.f32.mrf.mxu0
        %v737 = vadd.f32 %v624, %v736
        %738 = vmatmul.f32.gmra.mxu0 %v487
        %v739 = vpop.f32.mrf.mxu0
        %v740 = vadd.f32 %v627, %v739
        %741 = vmatmul.f32.gmra.mxu0 %v489
        %v742 = vpop.f32.mrf.mxu0
        %v743 = vadd.f32 %v630, %v742
        %744 = vmatmul.f32.gmra.mxu0 %v491
        %v745 = vpop.f32.mrf.mxu0
        %v746 = vadd.f32 %v633, %v745
        %747 = vmatmul.f32.gmra.mxu0 %v493
        %v748 = vpop.f32.mrf.mxu0
        %v749 = vadd.f32 %v636, %v748
        %750 = vmatmul.f32.gmra.mxu0 %v495
        %v751 = vpop.f32.mrf.mxu0
        %v752 = vadd.f32 %v639, %v751
        %753 = vmatmul.f32.gmra.mxu0 %v497
        %v754 = vpop.f32.mrf.mxu0
        %v755 = vadd.f32 %v642, %v754
        %756 = vmatmul.f32.gmra.mxu0 %v499
        %v757 = vpop.f32.mrf.mxu0
        %v758 = vadd.f32 %v645, %v757
        %759 = vmatmul.f32.gmra.mxu0 %v501
        %v760 = vpop.f32.mrf.mxu0
        %v761 = vadd.f32 %v648, %v760
        %762 = vmatmul.f32.gmra.mxu0 %v503
        %v763 = vpop.f32.mrf.mxu0
        %v764 = vadd.f32 %v651, %v763
        %765 = vmatmul.f32.gmra.mxu0 %v505
        %v766 = vpop.f32.mrf.mxu0
        %v767 = vadd.f32 %v654, %v766
        %768 = vmatmul.f32.gmra.mxu0 %v507
        %v769 = vpop.f32.mrf.mxu0
        %v770 = vadd.f32 %v657, %v769
        %771 = vmatmul.f32.gmra.mxu0 %v509
        %v772 = vpop.f32.mrf.mxu0
        %v773 = vadd.f32 %v660, %v772
        %774 = vmatmul.f32.gmra.mxu0 %v511
        %v775 = vpop.f32.mrf.mxu0
        %v776 = vadd.f32 %v663, %v775
        %777 = vdwg.mxu0
        %v778 = vld [vmem:[#allocation8] sm:$0xff]
        %v779 = vld [vmem:[#allocation8 + $0x8] sm:$0xff]
        %v780 = vld [vmem:[#allocation8 + $0x10] sm:$0xff]
        %v781 = vld [vmem:[#allocation8 + $0x18] sm:$0xff]
        %v782 = vld [vmem:[#allocation8 + $0x20] sm:$0xff]
        %v783 = vld [vmem:[#allocation8 + $0x28] sm:$0xff]
        %v784 = vld [vmem:[#allocation8 + $0x30] sm:$0xff]
        %v785 = vld [vmem:[#allocation8 + $0x38] sm:$0xff]
        %v786 = vld [vmem:[#allocation8 + $0x40] sm:$0xff]
        %v787 = vld [vmem:[#allocation8 + $0x48] sm:$0xff]
        %v788 = vld [vmem:[#allocation8 + $0x50] sm:$0xff]
        %v789 = vld [vmem:[#allocation8 + $0x58] sm:$0xff]
        %v790 = vld [vmem:[#allocation8 + $0x60] sm:$0xff]
        %v791 = vld [vmem:[#allocation8 + $0x68] sm:$0xff]
        %v792 = vld [vmem:[#allocation8 + $0x70] sm:$0xff]
        %v793 = vld [vmem:[#allocation8 + $0x78] sm:$0xff]
        %v794 = vld [vmem:[#allocation8 + $0x80] sm:$0xff]
        %v795 = vld [vmem:[#allocation8 + $0x88] sm:$0xff]
        %v796 = vld [vmem:[#allocation8 + $0x90] sm:$0xff]
        %v797 = vld [vmem:[#allocation8 + $0x98] sm:$0xff]
        %v798 = vld [vmem:[#allocation8 + $0xa0] sm:$0xff]
        %v799 = vld [vmem:[#allocation8 + $0xa8] sm:$0xff]
        %v800 = vld [vmem:[#allocation8 + $0xb0] sm:$0xff]
        %v801 = vld [vmem:[#allocation8 + $0xb8] sm:$0xff]
        %v802 = vld [vmem:[#allocation8 + $0xc0] sm:$0xff]
        %v803 = vld [vmem:[#allocation8 + $0xc8] sm:$0xff]
        %v804 = vld [vmem:[#allocation8 + $0xd0] sm:$0xff]
        %v805 = vld [vmem:[#allocation8 + $0xd8] sm:$0xff]
        %v806 = vld [vmem:[#allocation8 + $0xe0] sm:$0xff]
        %v807 = vld [vmem:[#allocation8 + $0xe8] sm:$0xff]
        %v808 = vld [vmem:[#allocation8 + $0xf0] sm:$0xff]
        %v809 = vld [vmem:[#allocation8 + $0xf8] sm:$0xff]
        %v810 = vld [vmem:[%s5] sm:$0x1]
        %v812 = vperm.slane %v810, 0
        %818 = vst [vmem:[#allocation1] ss:$9 sm:$0xff] %v512
        %s819 = scalar_lea.vmem [#allocation1], 1
        %820 = vst [vmem:[%s819] ss:$9 sm:$0xff] %v513
        %s821 = scalar_lea.vmem [#allocation1], 2
        %822 = vst [vmem:[%s821] ss:$9 sm:$0xff] %v514
        %s823 = scalar_lea.vmem [#allocation1], 3
        %824 = vst [vmem:[%s823] ss:$9 sm:$0xff] %v515
        %v825 = vld [vmem:[#allocation1] sm:$0xff]
        %v826 = vld [vmem:[#allocation1 + $0x9] sm:$0xff]
        %829 = vmatpush.msra.mxu0 %v793
        %830 = vmatpush.msra.mxu0 %v792
        %831 = vmatpush.msra.mxu0 %v791
        %832 = vmatpush.msra.mxu0 %v790
        %833 = vmatpush.msra.mxu0 %v789
        %834 = vmatpush.msra.mxu0 %v788
        %835 = vmatpush.msra.mxu0 %v787
        %836 = vmatpush.msra.mxu0 %v786
        %837 = vmatpush.msra.mxu0 %v785
        %838 = vmatpush.msra.mxu0 %v784
        %839 = vmatpush.msra.mxu0 %v783
        %840 = vmatpush.msra.mxu0 %v782
        %841 = vmatpush.msra.mxu0 %v781
        %842 = vmatpush.msra.mxu0 %v780
        %843 = vmatpush.msra.mxu0 %v779
        %844 = vmatpush.msra.mxu0 %v778
        %845 = vmatmul.f32.gmra.mxu0 %v825
        %v846 = vpop.f32.mrf.mxu0
        %v847 = vadd.f32 %v812, %v846
        %848 = vdwg.mxu0
        %849 = vmatpush.msra.mxu0 %v809
        %850 = vmatpush.msra.mxu0 %v808
        %851 = vmatpush.msra.mxu0 %v807
        %852 = vmatpush.msra.mxu0 %v806
        %853 = vmatpush.msra.mxu0 %v805
        %854 = vmatpush.msra.mxu0 %v804
        %855 = vmatpush.msra.mxu0 %v803
        %856 = vmatpush.msra.mxu0 %v802
        %857 = vmatpush.msra.mxu0 %v801
        %858 = vmatpush.msra.mxu0 %v800
        %859 = vmatpush.msra.mxu0 %v799
        %860 = vmatpush.msra.mxu0 %v798
        %861 = vmatpush.msra.mxu0 %v797
        %862 = vmatpush.msra.mxu0 %v796
        %863 = vmatpush.msra.mxu0 %v795
        %864 = vmatpush.msra.mxu0 %v794
        %865 = vmatmul.f32.gmra.mxu0 %v826
        %v866 = vpop.f32.mrf.mxu0
        %v867 = vadd.f32 %v847, %v866
        %868 = vdwg.mxu0
        %v870 = vrot.slane %v867, 1
        %v871 = vrot.slane %v867, 2
        %v872 = vrot.slane %v867, 3
        %v873 = vperm.slane %v867, 0
        %v874 = vperm.slane %v870, 0
        %v875 = vperm.slane %v871, 0
        %v876 = vperm.slane %v872, 0
        %v881 = vadd.f32 %v683, %v873
        %v882 = vadd.f32 %v686, %v873
        %v883 = vadd.f32 %v689, %v873
        %v884 = vadd.f32 %v692, %v873
        %v885 = vadd.f32 %v695, %v873
        %v886 = vadd.f32 %v698, %v873
        %v887 = vadd.f32 %v701, %v873
        %v888 = vadd.f32 %v704, %v873
        %v889 = vadd.f32 %v707, %v874
        %v890 = vadd.f32 %v710, %v874
        %v891 = vadd.f32 %v713, %v874
        %v892 = vadd.f32 %v716, %v874
        %v893 = vadd.f32 %v719, %v874
        %v894 = vadd.f32 %v722, %v874
        %v895 = vadd.f32 %v725, %v874
        %v896 = vadd.f32 %v728, %v874
        %v897 = vadd.f32 %v731, %v875
        %v898 = vadd.f32 %v734, %v875
        %v899 = vadd.f32 %v737, %v875
        %v900 = vadd.f32 %v740, %v875
        %v901 = vadd.f32 %v743, %v875
        %v902 = vadd.f32 %v746, %v875
        %v903 = vadd.f32 %v749, %v875
        %v904 = vadd.f32 %v752, %v875
        %v905 = vadd.f32 %v755, %v876
        %v906 = vadd.f32 %v758, %v876
        %v907 = vadd.f32 %v761, %v876
        %v908 = vadd.f32 %v764, %v876
        %v909 = vadd.f32 %v767, %v876
        %v910 = vadd.f32 %v770, %v876
        %v911 = vadd.f32 %v773, %v876
        %v912 = vadd.f32 %v776, %v876
        %v913 = vtanh.pop %v881
        %v914 = vtanh.pop %v882
        %v915 = vtanh.pop %v883
        %v916 = vtanh.pop %v884
        %v917 = vtanh.pop %v885
        %v918 = vtanh.pop %v886
        %v919 = vtanh.pop %v887
        %v920 = vtanh.pop %v888
        %v921 = vtanh.pop %v889
        %v922 = vtanh.pop %v890
        %v923 = vtanh.pop %v891
        %v924 = vtanh.pop %v892
        %v925 = vtanh.pop %v893
        %v926 = vtanh.pop %v894
        %v927 = vtanh.pop %v895
        %v928 = vtanh.pop %v896
        %v929 = vtanh.pop %v897
        %v930 = vtanh.pop %v898
        %v931 = vtanh.pop %v899
        %v932 = vtanh.pop %v900
        %v933 = vtanh.pop %v901
        %v934 = vtanh.pop %v902
        %v935 = vtanh.pop %v903
        %v936 = vtanh.pop %v904
        %v937 = vtanh.pop %v905
        %v938 = vtanh.pop %v906
        %v939 = vtanh.pop %v907
        %v940 = vtanh.pop %v908
        %v941 = vtanh.pop %v909
        %v942 = vtanh.pop %v910
        %v943 = vtanh.pop %v911
        %v944 = vtanh.pop %v912
        %v945 = vld [vmem:[%s6] sm:$0x1]
        %946 = vmatpush.xpose.msra.mxu0 0.0
        %947 = vmatpush.xpose.msra.mxu0 0.0
        %948 = vmatpush.xpose.msra.mxu0 0.0
        %949 = vmatpush.xpose.msra.mxu0 0.0
        %950 = vmatpush.xpose.msra.mxu0 0.0
        %951 = vmatpush.xpose.msra.mxu0 0.0
        %952 = vmatpush.xpose.msra.mxu0 0.0
        %953 = vmatpush.xpose.msra.mxu0 0.0
        %954 = vmatpush.xpose.msra.mxu0 %v920
        %955 = vmatpush.xpose.msra.mxu0 %v919
        %956 = vmatpush.xpose.msra.mxu0 %v918
        %957 = vmatpush.xpose.msra.mxu0 %v917
        %958 = vmatpush.xpose.msra.mxu0 %v916
        %959 = vmatpush.xpose.msra.mxu0 %v915
        %960 = vmatpush.xpose.msra.mxu0 %v914
        %961 = vmatpush.xpose.msra.mxu0 %v913
        %962 = vmatmul.f32.gmra.mxu0 %v945
        %v963 = vpop.f32.mrf.mxu0
        %v964 = vadd.f32 0.0, %v963
        %965 = vdwg.mxu0
        %966 = vmatpush.xpose.msra.mxu0 0.0
        %967 = vmatpush.xpose.msra.mxu0 0.0
        %968 = vmatpush.xpose.msra.mxu0 0.0
        %969 = vmatpush.xpose.msra.mxu0 0.0
        %970 = vmatpush.xpose.msra.mxu0 0.0
        %971 = vmatpush.xpose.msra.mxu0 0.0
        %972 = vmatpush.xpose.msra.mxu0 0.0
        %973 = vmatpush.xpose.msra.mxu0 0.0
        %974 = vmatpush.xpose.msra.mxu0 %v928
        %975 = vmatpush.xpose.msra.mxu0 %v927
        %976 = vmatpush.xpose.msra.mxu0 %v926
        %977 = vmatpush.xpose.msra.mxu0 %v925
        %978 = vmatpush.xpose.msra.mxu0 %v924
        %979 = vmatpush.xpose.msra.mxu0 %v923
        %980 = vmatpush.xpose.msra.mxu0 %v922
        %981 = vmatpush.xpose.msra.mxu0 %v921
        %982 = vmatmul.f32.gmra.mxu0 %v945
        %v983 = vpop.f32.mrf.mxu0
        %v984 = vadd.f32 0.0, %v983
        %985 = vdwg.mxu0
        %986 = vmatpush.xpose.msra.mxu0 0.0
        %987 = vmatpush.xpose.msra.mxu0 0.0
        %988 = vmatpush.xpose.msra.mxu0 0.0
        %989 = vmatpush.xpose.msra.mxu0 0.0
        %990 = vmatpush.xpose.msra.mxu0 0.0
        %991 = vmatpush.xpose.msra.mxu0 0.0
        %992 = vmatpush.xpose.msra.mxu0 0.0
        %993 = vmatpush.xpose.msra.mxu0 0.0
        %994 = vmatpush.xpose.msra.mxu0 %v936
        %995 = vmatpush.xpose.msra.mxu0 %v935
        %996 = vmatpush.xpose.msra.mxu0 %v934
        %997 = vmatpush.xpose.msra.mxu0 %v933
        %998 = vmatpush.xpose.msra.mxu0 %v932
        %999 = vmatpush.xpose.msra.mxu0 %v931
        %1000 = vmatpush.xpose.msra.mxu0 %v930
        %1001 = vmatpush.xpose.msra.mxu0 %v929
        %1002 = vmatmul.f32.gmra.mxu0 %v945
        %v1003 = vpop.f32.mrf.mxu0
        %v1004 = vadd.f32 0.0, %v1003
        %1005 = vdwg.mxu0
        %1006 = vmatpush.xpose.msra.mxu0 0.0
        %1007 = vmatpush.xpose.msra.mxu0 0.0
        %1008 = vmatpush.xpose.msra.mxu0 0.0
        %1009 = vmatpush.xpose.msra.mxu0 0.0
        %1010 = vmatpush.xpose.msra.mxu0 0.0
        %1011 = vmatpush.xpose.msra.mxu0 0.0
        %1012 = vmatpush.xpose.msra.mxu0 0.0
        %1013 = vmatpush.xpose.msra.mxu0 0.0
        %1014 = vmatpush.xpose.msra.mxu0 %v944
        %1015 = vmatpush.xpose.msra.mxu0 %v943
        %1016 = vmatpush.xpose.msra.mxu0 %v942
        %1017 = vmatpush.xpose.msra.mxu0 %v941
        %1018 = vmatpush.xpose.msra.mxu0 %v940
        %1019 = vmatpush.xpose.msra.mxu0 %v939
        %1020 = vmatpush.xpose.msra.mxu0 %v938
        %1021 = vmatpush.xpose.msra.mxu0 %v937
        %1022 = vmatmul.f32.gmra.mxu0 %v945
        %v1023 = vpop.f32.mrf.mxu0
        %v1024 = vadd.f32 0.0, %v1023
        %1025 = vdwg.mxu0
        %vm1026 = vcmask 516096
        %v1027 = vsel %vm1026, %v964, -inf
        %1028 = vmax.xlane.f32.xlu0 %v1027
        %v1029 = vpop.xlane.xlu0 %1028
        %v1030 = vsel %vm1026, %v984, -inf
        %1031 = vmax.xlane.f32.xlu0 %v1030
        %v1032 = vpop.xlane.xlu0 %1031
        %v1033 = vsel %vm1026, %v1004, -inf
        %1034 = vmax.xlane.f32.xlu0 %v1033
        %v1035 = vpop.xlane.xlu0 %1034
        %v1036 = vsel %vm1026, %v1024, -inf
        %1037 = vmax.xlane.f32.xlu0 %v1036
        %v1038 = vpop.xlane.xlu0 %1037
        %v1039 = vsub.f32 %v964, %v1029
        %v1040 = vsub.f32 %v984, %v1032
        %v1041 = vsub.f32 %v1004, %v1035
        %v1042 = vsub.f32 %v1024, %v1038
        %v1043 = vmul.f32 %v1039, 1.442695
        %v1044 = vpow.pop %v1043
        %v1045 = vmul.f32 %v1040, 1.442695
        %v1046 = vpow.pop %v1045
        %v1047 = vmul.f32 %v1041, 1.442695
        %v1048 = vpow.pop %v1047
        %v1049 = vmul.f32 %v1042, 1.442695
        %v1050 = vpow.pop %v1049
        %v1051 = vsel %vm1026, %v1044, 0.0
        %1052 = vadd.xlane.f32.xlu0 %v1051
        %v1053 = vpop.xlane.xlu0 %1052
        %v1054 = vsel %vm1026, %v1046, 0.0
        %1055 = vadd.xlane.f32.xlu0 %v1054
        %v1056 = vpop.xlane.xlu0 %1055
        %v1057 = vsel %vm1026, %v1048, 0.0
        %1058 = vadd.xlane.f32.xlu0 %v1057
        %v1059 = vpop.xlane.xlu0 %1058
        %v1060 = vsel %vm1026, %v1050, 0.0
        %1061 = vadd.xlane.f32.xlu0 %v1060
        %v1062 = vpop.xlane.xlu0 %1061
        %v1063 = vrcp.pop %v1053
        %v1064 = vrcp.pop %v1056
        %v1065 = vrcp.pop %v1059
        %v1066 = vrcp.pop %v1062
        %v1067 = vmul.f32 %v1044, %v1063
        %v1068 = vmul.f32 %v1046, %v1064
        %v1069 = vmul.f32 %v1048, %v1065
        %v1070 = vmul.f32 %v1050, %v1066
        %vm1071 = vcmask 523264
        %v1073 = vsel %vm1071, %v1067, 0
        %1075 = vmatpush.msra.mxu0 0.0
        %1076 = vmatpush.msra.mxu0 0.0
        %1077 = vmatpush.msra.mxu0 0.0
        %1078 = vmatpush.msra.mxu0 0.0
        %1079 = vmatpush.msra.mxu0 0.0
        %1080 = vmatpush.msra.mxu0 0.0
        %1081 = vmatpush.msra.mxu0 0.0
        %1082 = vmatpush.msra.mxu0 0.0
        %1083 = vmatpush.msra.mxu0 %v462
        %1084 = vmatpush.msra.mxu0 %v460
        %1085 = vmatpush.msra.mxu0 %v458
        %1086 = vmatpush.msra.mxu0 %v456
        %1087 = vmatpush.msra.mxu0 %v454
        %1088 = vmatpush.msra.mxu0 %v452
        %1089 = vmatpush.msra.mxu0 %v450
        %1090 = vmatpush.msra.mxu0 %v448
        %1091 = vmatmul.f32.gmra.mxu0 %v1073
        %v1092 = vpop.f32.mrf.mxu0
        %v1093 = vadd.f32 0.0, %v1092
        %1094 = vdwg.mxu0
        %1095 = vmatpush.msra.mxu0 0.0
        %1096 = vmatpush.msra.mxu0 0.0
        %1097 = vmatpush.msra.mxu0 0.0
        %1098 = vmatpush.msra.mxu0 0.0
        %1099 = vmatpush.msra.mxu0 0.0
        %1100 = vmatpush.msra.mxu0 0.0
        %1101 = vmatpush.msra.mxu0 0.0
        %1102 = vmatpush.msra.mxu0 0.0
        %1103 = vmatpush.msra.mxu0 %v463
        %1104 = vmatpush.msra.mxu0 %v461
        %1105 = vmatpush.msra.mxu0 %v459
        %1106 = vmatpush.msra.mxu0 %v457
        %1107 = vmatpush.msra.mxu0 %v455
        %1108 = vmatpush.msra.mxu0 %v453
        %1109 = vmatpush.msra.mxu0 %v451
        %1110 = vmatpush.msra.mxu0 %v449
        %1111 = vmatmul.f32.gmra.mxu0 %v1073
        %v1112 = vpop.f32.mrf.mxu0
        %v1113 = vadd.f32 0.0, %v1112
        %1114 = vdwg.mxu0
        %v1116 = vsel %vm1071, %v1068, 0
        %1118 = vmatpush.msra.mxu0 0.0
        %1119 = vmatpush.msra.mxu0 0.0
        %1120 = vmatpush.msra.mxu0 0.0
        %1121 = vmatpush.msra.mxu0 0.0
        %1122 = vmatpush.msra.mxu0 0.0
        %1123 = vmatpush.msra.mxu0 0.0
        %1124 = vmatpush.msra.mxu0 0.0
        %1125 = vmatpush.msra.mxu0 0.0
        %1126 = vmatpush.msra.mxu0 %v478
        %1127 = vmatpush.msra.mxu0 %v476
        %1128 = vmatpush.msra.mxu0 %v474
        %1129 = vmatpush.msra.mxu0 %v472
        %1130 = vmatpush.msra.mxu0 %v470
        %1131 = vmatpush.msra.mxu0 %v468
        %1132 = vmatpush.msra.mxu0 %v466
        %1133 = vmatpush.msra.mxu0 %v464
        %1134 = vmatmul.f32.gmra.mxu0 %v1116
        %v1135 = vpop.f32.mrf.mxu0
        %v1136 = vadd.f32 0.0, %v1135
        %1137 = vdwg.mxu0
        %1138 = vmatpush.msra.mxu0 0.0
        %1139 = vmatpush.msra.mxu0 0.0
        %1140 = vmatpush.msra.mxu0 0.0
        %1141 = vmatpush.msra.mxu0 0.0
        %1142 = vmatpush.msra.mxu0 0.0
        %1143 = vmatpush.msra.mxu0 0.0
        %1144 = vmatpush.msra.mxu0 0.0
        %1145 = vmatpush.msra.mxu0 0.0
        %1146 = vmatpush.msra.mxu0 %v479
        %1147 = vmatpush.msra.mxu0 %v477
        %1148 = vmatpush.msra.mxu0 %v475
        %1149 = vmatpush.msra.mxu0 %v473
        %1150 = vmatpush.msra.mxu0 %v471
        %1151 = vmatpush.msra.mxu0 %v469
        %1152 = vmatpush.msra.mxu0 %v467
        %1153 = vmatpush.msra.mxu0 %v465
        %1154 = vmatmul.f32.gmra.mxu0 %v1116
        %v1155 = vpop.f32.mrf.mxu0
        %v1156 = vadd.f32 0.0, %v1155
        %1157 = vdwg.mxu0
        %v1159 = vsel %vm1071, %v1069, 0
        %1161 = vmatpush.msra.mxu0 0.0
        %1162 = vmatpush.msra.mxu0 0.0
        %1163 = vmatpush.msra.mxu0 0.0
        %1164 = vmatpush.msra.mxu0 0.0
        %1165 = vmatpush.msra.mxu0 0.0
        %1166 = vmatpush.msra.mxu0 0.0
        %1167 = vmatpush.msra.mxu0 0.0
        %1168 = vmatpush.msra.mxu0 0.0
        %1169 = vmatpush.msra.mxu0 %v494
        %1170 = vmatpush.msra.mxu0 %v492
        %1171 = vmatpush.msra.mxu0 %v490
        %1172 = vmatpush.msra.mxu0 %v488
        %1173 = vmatpush.msra.mxu0 %v486
        %1174 = vmatpush.msra.mxu0 %v484
        %1175 = vmatpush.msra.mxu0 %v482
        %1176 = vmatpush.msra.mxu0 %v480
        %1177 = vmatmul.f32.gmra.mxu0 %v1159
        %v1178 = vpop.f32.mrf.mxu0
        %v1179 = vadd.f32 0.0, %v1178
        %1180 = vdwg.mxu0
        %1181 = vmatpush.msra.mxu0 0.0
        %1182 = vmatpush.msra.mxu0 0.0
        %1183 = vmatpush.msra.mxu0 0.0
        %1184 = vmatpush.msra.mxu0 0.0
        %1185 = vmatpush.msra.mxu0 0.0
        %1186 = vmatpush.msra.mxu0 0.0
        %1187 = vmatpush.msra.mxu0 0.0
        %1188 = vmatpush.msra.mxu0 0.0
        %1189 = vmatpush.msra.mxu0 %v495
        %1190 = vmatpush.msra.mxu0 %v493
        %1191 = vmatpush.msra.mxu0 %v491
        %1192 = vmatpush.msra.mxu0 %v489
        %1193 = vmatpush.msra.mxu0 %v487
        %1194 = vmatpush.msra.mxu0 %v485
        %1195 = vmatpush.msra.mxu0 %v483
        %1196 = vmatpush.msra.mxu0 %v481
        %1197 = vmatmul.f32.gmra.mxu0 %v1159
        %v1198 = vpop.f32.mrf.mxu0
        %v1199 = vadd.f32 0.0, %v1198
        %1200 = vdwg.mxu0
        %v1202 = vsel %vm1071, %v1070, 0
        %1204 = vmatpush.msra.mxu0 0.0
        %1205 = vmatpush.msra.mxu0 0.0
        %1206 = vmatpush.msra.mxu0 0.0
        %1207 = vmatpush.msra.mxu0 0.0
        %1208 = vmatpush.msra.mxu0 0.0
        %1209 = vmatpush.msra.mxu0 0.0
        %1210 = vmatpush.msra.mxu0 0.0
        %1211 = vmatpush.msra.mxu0 0.0
        %1212 = vmatpush.msra.mxu0 %v510
        %1213 = vmatpush.msra.mxu0 %v508
        %1214 = vmatpush.msra.mxu0 %v506
        %1215 = vmatpush.msra.mxu0 %v504
        %1216 = vmatpush.msra.mxu0 %v502
        %1217 = vmatpush.msra.mxu0 %v500
        %1218 = vmatpush.msra.mxu0 %v498
        %1219 = vmatpush.msra.mxu0 %v496
        %1220 = vmatmul.f32.gmra.mxu0 %v1202
        %v1221 = vpop.f32.mrf.mxu0
        %v1222 = vadd.f32 0.0, %v1221
        %1223 = vdwg.mxu0
        %1224 = vmatpush.msra.mxu0 0.0
        %1225 = vmatpush.msra.mxu0 0.0
        %1226 = vmatpush.msra.mxu0 0.0
        %1227 = vmatpush.msra.mxu0 0.0
        %1228 = vmatpush.msra.mxu0 0.0
        %1229 = vmatpush.msra.mxu0 0.0
        %1230 = vmatpush.msra.mxu0 0.0
        %1231 = vmatpush.msra.mxu0 0.0
        %1232 = vmatpush.msra.mxu0 %v511
        %1233 = vmatpush.msra.mxu0 %v509
        %1234 = vmatpush.msra.mxu0 %v507
        %1235 = vmatpush.msra.mxu0 %v505
        %1236 = vmatpush.msra.mxu0 %v503
        %1237 = vmatpush.msra.mxu0 %v501
        %1238 = vmatpush.msra.mxu0 %v499
        %1239 = vmatpush.msra.mxu0 %v497
        %1240 = vmatmul.f32.gmra.mxu0 %v1202
        %v1241 = vpop.f32.mrf.mxu0
        %v1242 = vadd.f32 0.0, %v1241
        %1243 = vdwg.mxu0
        %v1244 = vld [vmem:[#allocation10] sm:$0xff]
        %v1245 = vld [vmem:[#allocation10 + $0x8] sm:$0xff]
        %v1246 = vld [vmem:[#allocation10 + $0x10] sm:$0xff]
        %v1247 = vld [vmem:[#allocation10 + $0x18] sm:$0xff]
        %v1248 = vld [vmem:[#allocation10 + $0x20] sm:$0xff]
        %v1249 = vld [vmem:[#allocation10 + $0x28] sm:$0xff]
        %v1250 = vld [vmem:[#allocation10 + $0x30] sm:$0xff]
        %v1251 = vld [vmem:[#allocation10 + $0x38] sm:$0xff]
        %v1252 = vld [vmem:[#allocation10 + $0x40] sm:$0xff]
        %v1253 = vld [vmem:[#allocation10 + $0x48] sm:$0xff]
        %v1254 = vld [vmem:[#allocation10 + $0x50] sm:$0xff]
        %v1255 = vld [vmem:[#allocation10 + $0x58] sm:$0xff]
        %v1256 = vld [vmem:[#allocation10 + $0x60] sm:$0xff]
        %v1257 = vld [vmem:[#allocation10 + $0x68] sm:$0xff]
        %v1258 = vld [vmem:[#allocation10 + $0x70] sm:$0xff]
        %v1259 = vld [vmem:[#allocation10 + $0x78] sm:$0xff]
        %v1260 = vld [vmem:[#allocation10 + $0x80] sm:$0xff]
        %v1261 = vld [vmem:[#allocation10 + $0x88] sm:$0xff]
        %v1262 = vld [vmem:[#allocation10 + $0x90] sm:$0xff]
        %v1263 = vld [vmem:[#allocation10 + $0x98] sm:$0xff]
        %v1264 = vld [vmem:[#allocation10 + $0xa0] sm:$0xff]
        %v1265 = vld [vmem:[#allocation10 + $0xa8] sm:$0xff]
        %v1266 = vld [vmem:[#allocation10 + $0xb0] sm:$0xff]
        %v1267 = vld [vmem:[#allocation10 + $0xb8] sm:$0xff]
        %v1268 = vld [vmem:[#allocation10 + $0xc0] sm:$0xff]
        %v1269 = vld [vmem:[#allocation10 + $0xc8] sm:$0xff]
        %v1270 = vld [vmem:[#allocation10 + $0xd0] sm:$0xff]
        %v1271 = vld [vmem:[#allocation10 + $0xd8] sm:$0xff]
        %v1272 = vld [vmem:[#allocation10 + $0xe0] sm:$0xff]
        %v1273 = vld [vmem:[#allocation10 + $0xe8] sm:$0xff]
        %v1274 = vld [vmem:[#allocation10 + $0xf0] sm:$0xff]
        %v1275 = vld [vmem:[#allocation10 + $0xf8] sm:$0xff]
        %v1276 = vld [vmem:[#allocation10 + $0x100] sm:$0xff]
        %v1277 = vld [vmem:[#allocation10 + $0x108] sm:$0xff]
        %v1278 = vld [vmem:[#allocation10 + $0x110] sm:$0xff]
        %v1279 = vld [vmem:[#allocation10 + $0x118] sm:$0xff]
        %v1280 = vld [vmem:[#allocation10 + $0x120] sm:$0xff]
        %v1281 = vld [vmem:[#allocation10 + $0x128] sm:$0xff]
        %v1282 = vld [vmem:[#allocation10 + $0x130] sm:$0xff]
        %v1283 = vld [vmem:[#allocation10 + $0x138] sm:$0xff]
        %v1284 = vld [vmem:[#allocation10 + $0x140] sm:$0xff]
        %v1285 = vld [vmem:[#allocation10 + $0x148] sm:$0xff]
        %v1286 = vld [vmem:[#allocation10 + $0x150] sm:$0xff]
        %v1287 = vld [vmem:[#allocation10 + $0x158] sm:$0xff]
        %v1288 = vld [vmem:[#allocation10 + $0x160] sm:$0xff]
        %v1289 = vld [vmem:[#allocation10 + $0x168] sm:$0xff]
        %v1290 = vld [vmem:[#allocation10 + $0x170] sm:$0xff]
        %v1291 = vld [vmem:[#allocation10 + $0x178] sm:$0xff]
        %v1292 = vld [vmem:[#allocation10 + $0x180] sm:$0xff]
        %v1293 = vld [vmem:[#allocation10 + $0x188] sm:$0xff]
        %v1294 = vld [vmem:[#allocation10 + $0x190] sm:$0xff]
        %v1295 = vld [vmem:[#allocation10 + $0x198] sm:$0xff]
        %v1296 = vld [vmem:[#allocation10 + $0x1a0] sm:$0xff]
        %v1297 = vld [vmem:[#allocation10 + $0x1a8] sm:$0xff]
        %v1298 = vld [vmem:[#allocation10 + $0x1b0] sm:$0xff]
        %v1299 = vld [vmem:[#allocation10 + $0x1b8] sm:$0xff]
        %v1300 = vld [vmem:[#allocation10 + $0x1c0] sm:$0xff]
        %v1301 = vld [vmem:[#allocation10 + $0x1c8] sm:$0xff]
        %v1302 = vld [vmem:[#allocation10 + $0x1d0] sm:$0xff]
        %v1303 = vld [vmem:[#allocation10 + $0x1d8] sm:$0xff]
        %v1304 = vld [vmem:[#allocation10 + $0x1e0] sm:$0xff]
        %v1305 = vld [vmem:[#allocation10 + $0x1e8] sm:$0xff]
        %v1306 = vld [vmem:[#allocation10 + $0x1f0] sm:$0xff]
        %v1307 = vld [vmem:[#allocation10 + $0x1f8] sm:$0xff]
        %v1308 = vld [vmem:[%s8] sm:$0x3]
        %v1310 = vperm.slane %v1308, 0
        %v1311 = vperm.slane %v1308, 1
        %v1322 = vrot.slane %v1136, 7
        %vm1323 = vcmask 1041409
        %v1324 = vsel %vm1323, %v1322, %v1093
        %v1325 = vrot.slane %v1179, 6
        %vm1326 = vcmask 1042434
        %v1327 = vsel %vm1326, %v1325, %v1324
        %v1328 = vrot.slane %v1222, 5
        %vm1329 = vcmask 1043459
        %v1330 = vsel %vm1329, %v1328, %v1327
        %v1331 = vrot.slane %v1156, 7
        %v1332 = vsel %vm1323, %v1331, %v1113
        %v1333 = vrot.slane %v1199, 6
        %v1334 = vsel %vm1326, %v1333, %v1332
        %v1335 = vrot.slane %v1242, 5
        %v1336 = vsel %vm1329, %v1335, %v1334
        %1339 = vmatpush.msra.mxu0 %v1274
        %1340 = vmatpush.msra.mxu0 %v1272
        %1341 = vmatpush.msra.mxu0 %v1270
        %1342 = vmatpush.msra.mxu0 %v1268
        %1343 = vmatpush.msra.mxu0 %v1266
        %1344 = vmatpush.msra.mxu0 %v1264
        %1345 = vmatpush.msra.mxu0 %v1262
        %1346 = vmatpush.msra.mxu0 %v1260
        %1347 = vmatpush.msra.mxu0 %v1258
        %1348 = vmatpush.msra.mxu0 %v1256
        %1349 = vmatpush.msra.mxu0 %v1254
        %1350 = vmatpush.msra.mxu0 %v1252
        %1351 = vmatpush.msra.mxu0 %v1250
        %1352 = vmatpush.msra.mxu0 %v1248
        %1353 = vmatpush.msra.mxu0 %v1246
        %1354 = vmatpush.msra.mxu0 %v1244
        %1355 = vmatmul.f32.gmra.mxu0 %v1330
        %v1356 = vpop.f32.mrf.mxu0
        %v1357 = vadd.f32 %v1310, %v1356
        %1358 = vdwg.mxu0
        %1359 = vmatpush.msra.mxu0 %v1306
        %1360 = vmatpush.msra.mxu0 %v1304
        %1361 = vmatpush.msra.mxu0 %v1302
        %1362 = vmatpush.msra.mxu0 %v1300
        %1363 = vmatpush.msra.mxu0 %v1298
        %1364 = vmatpush.msra.mxu0 %v1296
        %1365 = vmatpush.msra.mxu0 %v1294
        %1366 = vmatpush.msra.mxu0 %v1292
        %1367 = vmatpush.msra.mxu0 %v1290
        %1368 = vmatpush.msra.mxu0 %v1288
        %1369 = vmatpush.msra.mxu0 %v1286
        %1370 = vmatpush.msra.mxu0 %v1284
        %1371 = vmatpush.msra.mxu0 %v1282
        %1372 = vmatpush.msra.mxu0 %v1280
        %1373 = vmatpush.msra.mxu0 %v1278
        %1374 = vmatpush.msra.mxu0 %v1276
        %1375 = vmatmul.f32.gmra.mxu0 %v1336
        %v1376 = vpop.f32.mrf.mxu0
        %v1377 = vadd.f32 %v1357, %v1376
        %1378 = vdwg.mxu0
        %1379 = vmatpush.msra.mxu0 %v1275
        %1380 = vmatpush.msra.mxu0 %v1273
        %1381 = vmatpush.msra.mxu0 %v1271
        %1382 = vmatpush.msra.mxu0 %v1269
        %1383 = vmatpush.msra.mxu0 %v1267
        %1384 = vmatpush.msra.mxu0 %v1265
        %1385 = vmatpush.msra.mxu0 %v1263
        %1386 = vmatpush.msra.mxu0 %v1261
        %1387 = vmatpush.msra.mxu0 %v1259
        %1388 = vmatpush.msra.mxu0 %v1257
        %1389 = vmatpush.msra.mxu0 %v1255
        %1390 = vmatpush.msra.mxu0 %v1253
        %1391 = vmatpush.msra.mxu0 %v1251
        %1392 = vmatpush.msra.mxu0 %v1249
        %1393 = vmatpush.msra.mxu0 %v1247
        %1394 = vmatpush.msra.mxu0 %v1245
        %1395 = vmatmul.f32.gmra.mxu0 %v1330
        %v1396 = vpop.f32.mrf.mxu0
        %v1397 = vadd.f32 %v1311, %v1396
        %1398 = vdwg.mxu0
        %1399 = vmatpush.msra.mxu0 %v1307
        %1400 = vmatpush.msra.mxu0 %v1305
        %1401 = vmatpush.msra.mxu0 %v1303
        %1402 = vmatpush.msra.mxu0 %v1301
        %1403 = vmatpush.msra.mxu0 %v1299
        %1404 = vmatpush.msra.mxu0 %v1297
        %1405 = vmatpush.msra.mxu0 %v1295
        %1406 = vmatpush.msra.mxu0 %v1293
        %1407 = vmatpush.msra.mxu0 %v1291
        %1408 = vmatpush.msra.mxu0 %v1289
        %1409 = vmatpush.msra.mxu0 %v1287
        %1410 = vmatpush.msra.mxu0 %v1285
        %1411 = vmatpush.msra.mxu0 %v1283
        %1412 = vmatpush.msra.mxu0 %v1281
        %1413 = vmatpush.msra.mxu0 %v1279
        %1414 = vmatpush.msra.mxu0 %v1277
        %1415 = vmatmul.f32.gmra.mxu0 %v1336
        %v1416 = vpop.f32.mrf.mxu0
        %v1417 = vadd.f32 %v1397, %v1416
        %1418 = vdwg.mxu0
        %1419 = vst [vmem:[#allocation1] ss:$9 sm:$0xff] %v512
        %s1420 = scalar_lea.vmem [#allocation1], 1
        %1421 = vst [vmem:[%s1420] ss:$9 sm:$0xff] %v513
        %s1422 = scalar_lea.vmem [#allocation1], 2
        %1423 = vst [vmem:[%s1422] ss:$9 sm:$0xff] %v514
        %s1424 = scalar_lea.vmem [#allocation1], 3
        %1425 = vst [vmem:[%s1424] ss:$9 sm:$0xff] %v515
        %v1426 = vld [vmem:[#allocation1] sm:$0xff]
        %v1427 = vld [vmem:[#allocation1 + $0x9] sm:$0xff]
        %v1430 = vadd.f32 %v1377, %v1426
        %v1431 = vadd.f32 %v1417, %v1427
        %v1434 = vrot.slane %v1431, 7
        %vm1435 = vcmask 1040384
        %v1436 = vsel %vm1435, %v1430, %v1434
        %v1437 = vsel %vm1323, %v1430, %v1434
        %v1438 = vrot.slane %v1437, 1
        %v1439 = vsel %vm1326, %v1430, %v1434
        %v1440 = vrot.slane %v1439, 2
        %v1441 = vsel %vm1329, %v1430, %v1434
        %v1442 = vrot.slane %v1441, 3
        %v1447 = vlaneseq
        %vm1448 = vcmp.ge.s32.totalorder %v1447, 0
        %vm1449 = vcmp.lt.s32.totalorder %v1447, 256
        %vm1450 = vmand %vm1448, %vm1449
        %1451 = vst.msk [vmem:[%s444] sm:$0x3] %vm1450, %v1436
        %1452 = vst.msk [vmem:[%s444 + $0x2] sm:$0x3] %vm1450, %v1438
        %1453 = vst.msk [vmem:[%s444 + $0x4] sm:$0x3] %vm1450, %v1440
        %1454 = vst.msk [vmem:[%s444 + $0x6] sm:$0x3] %vm1450, %v1442
        %s1455 = sand.u32 %s237, 1
        %s1456 = scalar_lea.sflag [#allocation4], %s1455
        %s1457 = sand.u32 %s237, 1
        %s1458 = smul.addr %s1457, 8
        %s1459 = scalar_lea.vmem [#allocation11], %s1458
        // Predicated region
        $region77: #{tpu_custom_call.1} parent=55 // pred_check
          %p1460 = pneg %p247
        $region78: #{tpu_custom_call.1} parent=55 // pred_check_branch
          %1462 = sbr.rel (%p1460) target = $region80
        $region79: #{tpu_custom_call.1} parent=55 // pred_region
          %s1463 = smul.u32 4, %s30
          %1465 = vsyncadd %s1456, 0
          %s1466 = smul.addr %s1463, 2
          %s1467 = scalar_lea.hbm %s9, %s1466
          %s1468 = sshll.u32 %s1459, 4
          %s1469 = int_to_ptr.vmem [resolvable:$true] %s1468
          %s1470 = sshll.u32 %s1467, 4
          %s1471 = int_to_ptr.hbm [resolvable:$true] %s1470
          %1476 = dma.vmem_to_hbm [thread:$0]  %s1469, 128, %s1471, %s1456, 32, 32, 2
        $region80: #{tpu_custom_call.1} parent=55 // pred_fallthru
          _
      $region56: #{tpu_custom_call.1} parent=5 // pred_fallthru
        _
      %p1477 = scmp.le.s32.totalorder 2, %s25
      // Predicated region
      $region81: #{tpu_custom_call.1} parent=5 // pred_check
        %p1478 = pneg %p1477
      $region82: #{tpu_custom_call.1} parent=5 // pred_check_branch
        %1480 = sbr.rel (%p1478) target = $region84
      $region83: #{tpu_custom_call.1} parent=5 // pred_region
        %s1481 = ssub.s32 %s25, 2
        // Predicated region
        $region85: #{tpu_custom_call.1} parent=83 // pred_check
          %p1482 = pneg %p253
        $region86: #{tpu_custom_call.1} parent=83 // pred_check_branch
          %1484 = sbr.rel (%p1482) target = $region88
        $region87: #{tpu_custom_call.1} parent=83 // pred_region
          %s1485 = sand.u32 %s238, 1
          %s1486 = scalar_lea.sflag [#allocation4], %s1485
          %s1487 = sand.u32 %s238, 1
          %s1488 = smul.addr %s1487, 8
          %s1489 = scalar_lea.vmem [#allocation11], %s1488
          %1491 = dma.done %s1486, 128
        $region88: #{tpu_custom_call.1} parent=83 // pred_fallthru
          _
      $region84: #{tpu_custom_call.1} parent=5 // pred_fallthru
        _
    $region6: #{tpu_custom_call.1} parent=1 // loop_footer
      %s29 = sadd.s32 1, %s25
    $region7: #{tpu_custom_call.1} parent=1 // loop_footer_branch
      %24 = sbr.rel target = $region3
    $region8: #{tpu_custom_call.1} parent=1 // loop_exit
      _
    %1492 = vsyncpa [#allocation3], 1
    %s1493 = scalar_lea.sflag [#allocation3], 1
    %1494 = vsyncpa %s1493, 1
    %1495 = vsyncpa [#allocation6], 1
    %s1496 = scalar_lea.sflag [#allocation6], 1
    %1497 = vsyncpa %s1496, 1
    %1498 = vsyncpa [#allocation9], 1
    %1499 = vsyncpa [#allocation4], 1
    %s1500 = scalar_lea.sflag [#allocation4], 1
    %1501 = vsyncpa %s1500, 1

</llo_original>
